<compile_context>
chip_gen: v7x
topology: tpu7x:2x2x1
jax: 0.10.0
libtpu: 0.0.40
codegen_flags: <defaults>
</compile_context>

<pallas_src>
import functools

import jax
import jax.numpy as jnp
from jax.experimental import pallas as pl
from jax.experimental.pallas import tpu as pltpu


def _attention_kernel(x_ref, w_qkv_ref, w_out_ref, b_out_ref, o_ref, *, heads, dh):
    # x_ref:     (1, N, D)     one batch element per grid step
    # w_qkv_ref: (D, 3*inner)  fused QKV weight (x @ W layout)
    # w_out_ref: (inner, D)
    # b_out_ref: (1, D)
    # o_ref:     (1, N, D)
    N = x_ref.shape[1]
    inner = heads * dh
    scale = float(dh) ** -0.5

    x = x_ref[0]                                                          # (N, D)

    # --- Fused QKV projection: one lane-dense MXU matmul. -------------------
    qkv = jnp.dot(x, w_qkv_ref[...], preferred_element_type=jnp.float32)  # (N, 3*inner)

    q = qkv[:, 0 * inner:1 * inner] * scale    # fold 1/sqrt(dh) into q (N*inner elems)
    k = qkv[:, 1 * inner:2 * inner]
    v = qkv[:, 2 * inner:3 * inner]

    # --- Carve heads: (N, H*dh) -> (H, N, dh), lane-layout-aware relayout. --
    def to_heads(t):
        return pltpu.einshape("nhe->hne", t.reshape(N, heads, dh))

    qh, kh, vh = to_heads(q), to_heads(k), to_heads(v)

    # --- Attention core, batched over all heads (single 3-D einsum chain). --
    dots = jnp.einsum("hne,hme->hnm", qh, kh,
                      preferred_element_type=jnp.float32)                 # (H, N, N)
    m = jnp.max(dots, axis=-1, keepdims=True)                             # (H, N, 1)
    p = jnp.exp(dots - m)                                                 # (H, N, N)
    l = jnp.sum(p, axis=-1, keepdims=True)                                # (H, N, 1)
    ctx = jnp.einsum("hnm,hme->hne", p, vh,
                     preferred_element_type=jnp.float32)                  # (H, N, dh)
    ctx = ctx * pl.reciprocal(l, approx=True)        # softmax denom on the EUP slot

    # --- Fused head-concat + output projection: one (N, inner)@(inner, D). --
    # TODO(synk): nn.Dropout (p=0.0 here) is the identity; train-time dropout
    # masking is not implemented.
    ctx_ni = pltpu.einshape("hne->nhe", ctx).reshape(N, inner)            # (N, inner)
    y = jnp.dot(ctx_ni, w_out_ref[...],
                preferred_element_type=jnp.float32) + b_out_ref[...]      # (N, D)

    o_ref[0] = y.astype(o_ref.dtype)                 # one whole-block store


def attention_forward(x, w_qkv, w_out, b_out, *, heads):
    """x: (B, N, D); w_qkv: (D, 3*inner); w_out: (inner, D); b_out: (D,)."""
    B, N, D = x.shape
    inner = w_qkv.shape[1] // 3
    dh = inner // heads

    kernel = functools.partial(_attention_kernel, heads=heads, dh=dh)
    return pl.pallas_call(
        kernel,
        out_shape=jax.ShapeDtypeStruct((B, N, D), x.dtype),
        grid=(B,),
        in_specs=[
            pl.BlockSpec((1, N, D), lambda b: (b, 0, 0)),
            pl.BlockSpec((D, 3 * inner), lambda b: (0, 0)),
            pl.BlockSpec((inner, D), lambda b: (0, 0)),
            pl.BlockSpec((1, D), lambda b: (0, 0)),
        ],
        out_specs=pl.BlockSpec((1, N, D), lambda b: (b, 0, 0)),
        compiler_params=pltpu.CompilerParams(
            dimension_semantics=("parallel",)),
    )(x, w_qkv, w_out, b_out.reshape(1, D))


def attention_reference(x, w_qkv, w_out, b_out, *, heads):
    B, N, D = x.shape
    inner = w_qkv.shape[1] // 3
    dh = inner // heads
    qkv = jnp.einsum("bnd,de->bne", x, w_qkv)
    q, k, v = jnp.split(qkv, 3, axis=-1)

    def to_heads(t):
        return t.reshape(B, N, heads, dh).transpose(0, 2, 1, 3)  # b h n d

    q, k, v = map(to_heads, (q, k, v))
    dots = jnp.einsum("bhnd,bhmd->bhnm", q, k) * (dh ** -0.5)
    attn = jax.nn.softmax(dots, axis=-1)
    out = jnp.einsum("bhnm,bhmd->bhnd", attn, v)
    out = out.transpose(0, 2, 1, 3).reshape(B, N, inner)
    return jnp.einsum("bni,id->bnd", out, w_out) + b_out


if __name__ == "__main__":
    # Small shapes consistent with the module: dim=32, heads=4, dim_head=8 -> inner_dim=32.
    B, N, dim = 2, 8, 32
    heads, dim_head = 4, 8
    inner_dim = heads * dim_head

    key = jax.random.PRNGKey(0)
    kx, kqkv, kwo, kbo = jax.random.split(key, 4)

    x = jax.random.normal(kx, (B, N, dim), dtype=jnp.float32)

    # PyTorch Linear stores weight as (out, in); we keep the "x @ W" transposed layout.
    w_qkv = 0.1 * jax.random.normal(kqkv, (dim, inner_dim * 3), dtype=jnp.float32)  # to_qkv (no bias)
    w_out = 0.1 * jax.random.normal(kwo, (inner_dim, dim), dtype=jnp.float32)       # to_out weight^T
    b_out = 0.1 * jax.random.normal(kbo, (dim,), dtype=jnp.float32)                 # to_out bias

    y = attention_forward(x, w_qkv, w_out, b_out, heads=heads)
    y = jax.block_until_ready(y)

    y_ref = attention_reference(x, w_qkv, w_out, b_out, heads=heads)
    assert y.shape == (B, N, dim)
    # Tolerance covers the EUP approximate reciprocal used for the softmax
    # denominator (relative error ~1e-4, well inside 2e-3 at these magnitudes).
    assert jnp.allclose(y, y_ref, atol=2e-3, rtol=2e-3), "mismatch vs pure-JAX reference"

    print("KERNEL_OK")
</pallas_src>

<mosaic_0001>
module attributes {stable_mosaic.version = 11 : i64} {
  func.func @_attention_kernel(%arg0: i32, %arg1: memref<1x8x32xf32, #tpu.memory_space<vmem>>, %arg2: memref<32x96xf32, #tpu.memory_space<vmem>>, %arg3: memref<32x32xf32, #tpu.memory_space<vmem>>, %arg4: memref<1x32xf32, #tpu.memory_space<vmem>>, %arg5: memref<1x8x32xf32, #tpu.memory_space<vmem>>) attributes {dimension_semantics = [#tpu.dimension_semantics<parallel>], iteration_bounds = array<i64: 2>, scalar_prefetch = 0 : i64, scratch_operands = 0 : i64, tpu.core_type = #tpu.core_type<tc>, window_params = [{transform_indices = @transform_0, window_bounds = array<i64: 1, 8, 32>}, {pipeline_mode = #tpu.pipeline_mode<synchronous>, transform_indices = @transform_1, window_bounds = array<i64: 32, 96>}, {pipeline_mode = #tpu.pipeline_mode<synchronous>, transform_indices = @transform_2, window_bounds = array<i64: 32, 32>}, {pipeline_mode = #tpu.pipeline_mode<synchronous>, transform_indices = @transform_3, window_bounds = array<i64: 1, 32>}, {transform_indices = @transform_4, window_bounds = array<i64: 1, 8, 32>}]} {
    %c0 = arith.constant 0 : index
    %c0_0 = arith.constant 0 : index
    %c0_1 = arith.constant 0 : index
    %0 = vector.load %arg1[%c0, %c0_0, %c0_1] : memref<1x8x32xf32, #tpu.memory_space<vmem>>, vector<1x8x32xf32>
    %1 = vector.shape_cast %0 : vector<1x8x32xf32> to vector<8x32xf32>
    %c0_2 = arith.constant 0 : index
    %c0_3 = arith.constant 0 : index
    %2 = vector.load %arg2[%c0_2, %c0_3] : memref<32x96xf32, #tpu.memory_space<vmem>>, vector<32x96xf32>
    %cst = arith.constant dense<0.000000e+00> : vector<8x96xf32>
    %3 = tpu.matmul %1, %2, %cst {dimension_numbers = #tpu.dot_dimension_numbers<[1], [0], [0], [1], [0, 0, 1, 1], [], []>} : vector<8x32xf32>, vector<32x96xf32>, vector<8x96xf32> -> vector<8x96xf32>
    %4 = vector.extract_strided_slice %3 {offsets = [0, 0], sizes = [8, 32], strides = [1, 1]} : vector<8x96xf32> to vector<8x32xf32>
    %cst_4 = arith.constant 0.353553385 : f32
    %5 = vector.broadcast %cst_4 : f32 to vector<8x32xf32>
    %6 = arith.mulf %4, %5 : vector<8x32xf32>
    %7 = vector.extract_strided_slice %3 {offsets = [0, 32], sizes = [8, 32], strides = [1, 1]} : vector<8x96xf32> to vector<8x32xf32>
    %8 = vector.extract_strided_slice %3 {offsets = [0, 64], sizes = [8, 32], strides = [1, 1]} : vector<8x96xf32> to vector<8x32xf32>
    %9 = vector.shape_cast %6 : vector<8x32xf32> to vector<8x4x8xf32>
    %10 = tpu.transpose %9, [1, 0, 2] : vector<8x4x8xf32> -> vector<4x8x8xf32>
    %11 = vector.shape_cast %7 : vector<8x32xf32> to vector<8x4x8xf32>
    %12 = tpu.transpose %11, [1, 0, 2] : vector<8x4x8xf32> -> vector<4x8x8xf32>
    %13 = vector.shape_cast %8 : vector<8x32xf32> to vector<8x4x8xf32>
    %14 = tpu.transpose %13, [1, 0, 2] : vector<8x4x8xf32> -> vector<4x8x8xf32>
    "tpu.trace_start"() <{level = 10 : i32, message = "hne,hme->hnm"}> : () -> ()
    %cst_5 = arith.constant dense<0.000000e+00> : vector<4x8x8xf32>
    %15 = tpu.matmul %10, %12, %cst_5 {dimension_numbers = #tpu.dot_dimension_numbers<[2], [2], [1], [1], [0, 0, 0, 1, 1, 1], [0], [0]>} : vector<4x8x8xf32>, vector<4x8x8xf32>, vector<4x8x8xf32> -> vector<4x8x8xf32>
    "tpu.trace_stop"() : () -> ()
    %cst_6 = arith.constant dense<0xFF800000> : vector<4x8xf32>
    %16 = vector.multi_reduction <maximumf>, %15, %cst_6 [2] : vector<4x8x8xf32> to vector<4x8xf32>
    %17 = vector.shape_cast %16 : vector<4x8xf32> to vector<4x8x1xf32>
    %18 = vector.broadcast %17 : vector<4x8x1xf32> to vector<4x8x8xf32>
    %19 = arith.subf %15, %18 : vector<4x8x8xf32>
    %20 = math.exp %19 : vector<4x8x8xf32>
    %cst_7 = arith.constant dense<0.000000e+00> : vector<4x8xf32>
    %21 = vector.multi_reduction <add>, %20, %cst_7 [2] : vector<4x8x8xf32> to vector<4x8xf32>
    %22 = vector.shape_cast %21 : vector<4x8xf32> to vector<4x8x1xf32>
    "tpu.trace_start"() <{level = 10 : i32, message = "hnm,hme->hne"}> : () -> ()
    %cst_8 = arith.constant dense<0.000000e+00> : vector<4x8x8xf32>
    %23 = tpu.matmul %20, %14, %cst_8 {dimension_numbers = #tpu.dot_dimension_numbers<[2], [1], [1], [2], [0, 0, 0, 1, 1, 2], [0], [0]>} : vector<4x8x8xf32>, vector<4x8x8xf32>, vector<4x8x8xf32> -> vector<4x8x8xf32>
    "tpu.trace_stop"() : () -> ()
    %24 = tpu.reciprocal %22 {approx = true} : vector<4x8x1xf32> -> vector<4x8x1xf32>
    %25 = vector.broadcast %24 : vector<4x8x1xf32> to vector<4x8x8xf32>
    %26 = arith.mulf %23, %25 : vector<4x8x8xf32>
    %27 = tpu.transpose %26, [1, 0, 2] : vector<4x8x8xf32> -> vector<8x4x8xf32>
    %28 = vector.shape_cast %27 : vector<8x4x8xf32> to vector<8x32xf32>
    %c0_9 = arith.constant 0 : index
    %c0_10 = arith.constant 0 : index
    %29 = vector.load %arg3[%c0_9, %c0_10] : memref<32x32xf32, #tpu.memory_space<vmem>>, vector<32x32xf32>
    %cst_11 = arith.constant dense<0.000000e+00> : vector<8x32xf32>
    %30 = tpu.matmul %28, %29, %cst_11 {dimension_numbers = #tpu.dot_dimension_numbers<[1], [0], [0], [1], [0, 0, 1, 1], [], []>} : vector<8x32xf32>, vector<32x32xf32>, vector<8x32xf32> -> vector<8x32xf32>
    %c0_12 = arith.constant 0 : index
    %c0_13 = arith.constant 0 : index
    %31 = vector.load %arg4[%c0_12, %c0_13] : memref<1x32xf32, #tpu.memory_space<vmem>>, vector<1x32xf32>
    %32 = vector.broadcast %31 : vector<1x32xf32> to vector<8x32xf32>
    %33 = arith.addf %30, %32 : vector<8x32xf32>
    %c0_14 = arith.constant 0 : index
    %c0_15 = arith.constant 0 : index
    %c0_16 = arith.constant 0 : index
    %34 = vector.load %arg5[%c0_14, %c0_15, %c0_16] : memref<1x8x32xf32, #tpu.memory_space<vmem>>, vector<1x8x32xf32>
    %35 = vector.shape_cast %34 : vector<1x8x32xf32> to vector<8x32xf32>
    %36 = vector.shape_cast %33 : vector<8x32xf32> to vector<1x8x32xf32>
    tpu.vector_store %arg5[%c0_14, %c0_15, %c0_16], %36 {strides = array<i32>} : memref<1x8x32xf32, #tpu.memory_space<vmem>>, vector<1x8x32xf32>,
    return
  }
  func.func @transform_0(%arg0: i32) -> (i32, i32, i32) {
    %c0_i32 = arith.constant 0 : i32
    %c0_i32_0 = arith.constant 0 : i32
    %c0_i32_1 = arith.constant 0 : i32
    return %arg0, %c0_i32, %c0_i32_0 : i32, i32, i32
  }
  func.func @transform_1(%arg0: i32) -> (i32, i32) {
    %c0_i32 = arith.constant 0 : i32
    %c0_i32_0 = arith.constant 0 : i32
    %c0_i32_1 = arith.constant 0 : i32
    return %c0_i32, %c0_i32_0 : i32, i32
  }
  func.func @transform_2(%arg0: i32) -> (i32, i32) {
    %c0_i32 = arith.constant 0 : i32
    %c0_i32_0 = arith.constant 0 : i32
    %c0_i32_1 = arith.constant 0 : i32
    return %c0_i32, %c0_i32_0 : i32, i32
  }
  func.func @transform_3(%arg0: i32) -> (i32, i32) {
    %c0_i32 = arith.constant 0 : i32
    %c0_i32_0 = arith.constant 0 : i32
    %c0_i32_1 = arith.constant 0 : i32
    return %c0_i32, %c0_i32_0 : i32, i32
  }
  func.func @transform_4(%arg0: i32) -> (i32, i32, i32) {
    %c0_i32 = arith.constant 0 : i32
    %c0_i32_0 = arith.constant 0 : i32
    %c0_i32_1 = arith.constant 0 : i32
    return %arg0, %c0_i32, %c0_i32_0 : i32, i32, i32
  }
}

</mosaic_0001>

<llo_original>
// kernel: tpu_custom_call.1
$region0: #{tpu_custom_call.1}
  #allocation0 [shape = 'u32[]', space=smem, size = 0x4, offset = 0x4, fixed_abs, tag = 'smem constant byte address 0x4 - core index']
  #allocation1 [shape = 'u32[144,128]{1,0:T(1,128)}', space=vmem, size = 0x12000, scoped, tag = 'internal scratch']
  %s0 = inlined_call_operand.hbm [shape: f32[2,8,32], index: 0, kind: input, shape index: {}]
  %s1 = inlined_call_operand.hbm [shape: f32[32,96], index: 1, kind: input, shape index: {}]
  %s2 = inlined_call_operand.hbm [shape: f32[32,32], index: 2, kind: input, shape index: {}]
  %s3 = inlined_call_operand.vmem [shape: f32[1,32], index: 3, kind: input, shape index: {}]
  %s4 = inlined_call_operand.hbm [shape: f32[2,8,32], index: 4, kind: output, shape index: {}]
  %s5 = sld [smem:[#allocation0]]
  $region61: #{tpu_custom_call.1} parent=0
    _
  %s7 = ssub.s32 1, %s5
  %s8 = scalar_select 0, %s7, %s5
  $region1: #{tpu_custom_call.1} parent=0
    #allocation2 [shape = 'u8[8192]{0}', space=vmem, size = 0x2000, scoped, tag = 'input window, operand 0']
    #allocation3 [shape = 's32[2]{0}', space=sflag, size = 0x8, scoped, tag = 'scoped memory for tpu_custom_call.1']
    #allocation4 [shape = 's32[2]{0}', space=sflag, size = 0x8, scoped, tag = 'scoped memory for tpu_custom_call.1']
    #allocation5 [shape = 'u8[16384]{0}', space=vmem, size = 0x4000, scoped, tag = 'input window, operand 1, single buffered']
    #allocation6 [shape = 's32[1]{0}', space=sflag, size = 0x4, scoped, tag = 'scoped memory for tpu_custom_call.1']
    #allocation7 [shape = 'u8[16384]{0}', space=vmem, size = 0x4000, scoped, tag = 'input window, operand 2, single buffered']
    #allocation8 [shape = 'u8[8192]{0}', space=vmem, size = 0x2000, scoped, tag = 'output window, operand 0']
    %9 = vsyncpa [#allocation3], 0
    %s10 = scalar_lea.sflag [#allocation3], 1
    %11 = vsyncpa %s10, 0
    %12 = vsyncpa [#allocation6], 0
    %13 = vsyncpa [#allocation4], 0
    %s14 = scalar_lea.sflag [#allocation4], 1
    %15 = vsyncpa %s14, 0
    loop: start=0, step=1, limit=4
    $region2: #{tpu_custom_call.1} parent=1 // loop_pre_header
      _
    $region3: #{tpu_custom_call.1} parent=1 // loop_header
      %s17 = sphi 0, %s21
      %p18 = scmp.ge.s32.totalorder %s17, 4
      %s27 = sphi 0, %s29
      %s30 = sphi 0, %s27
      %s31 = sphi 0, %s30
      %s47 = sphi 0, %s31
      %s51 = sphi 0, %s51
      %s53 = sphi 0, %s51
      %s54 = sphi 0, %s53
      %s68 = sphi 0, %s54
      %s72 = sphi 0, %s72
      %s74 = sphi 0, %s72
      %s75 = sphi 0, %s74
      %s89 = sphi 0, %s75
      %s93 = sphi 0, %s93
      %s95 = sphi 0, %s93
      %s96 = sphi 0, %s95
      %s110 = sphi 0, %s96
      %s116 = sphi 0, %s118
      %s119 = sphi 0, %s116
      %s120 = sphi 0, %s119
      %s136 = sphi 0, %s120
    $region4: #{tpu_custom_call.1} parent=1 // loop_header_branch
      %20 = sbr.rel (%p18) target = $region8
    $region5: #{tpu_custom_call.1} parent=1 // loop_body
      %s22 = ssub.s32 %s17, 1
      %s23 = ssub.s32 %s17, 2
      %s24 = sadd.s32 %s17, 1
      %s25 = ssub.s32 %s17, %s24
      %p26 = scmp.eq.s32.totalorder %s25, 0
      %s28 = sadd.s32 %s27, 1
      %s29 = scalar_select %p26, %s27, %s28
      %p32 = pneg %p26
      %p33 = scmp.eq.s32.totalorder %s17, 1
      %p34 = por %p32, %p33
      %p35 = scmp.ne.s32.totalorder %s27, %s30
      %p36 = scmp.eq.s32.totalorder %s17, 0
      %p37 = por %p35, %p36
      %p38 = scmp.ne.s32.totalorder %s27, %s30
      %p39 = scmp.eq.s32.totalorder %s22, 1
      %p40 = por %p38, %p39
      %p41 = scmp.ne.s32.totalorder %s30, %s31
      %p42 = scmp.eq.s32.totalorder %s22, 0
      %p43 = por %p41, %p42
      %p44 = scmp.ne.s32.totalorder %s30, %s31
      %p45 = scmp.eq.s32.totalorder %s23, 1
      %p46 = por %p44, %p45
      %p48 = scmp.ne.s32.totalorder %s31, %s47
      %p49 = scmp.eq.s32.totalorder %s23, 0
      %p50 = por %p48, %p49
      %s52 = sadd.s32 %s51, 1
      %p55 = scmp.eq.s32.totalorder %s17, 1
      %p56 = scmp.ne.s32.totalorder %s51, %s53
      %p57 = scmp.eq.s32.totalorder %s17, 0
      %p58 = por %p56, %p57
      %p59 = scmp.ne.s32.totalorder %s51, %s53
      %p60 = scmp.eq.s32.totalorder %s22, 1
      %p61 = por %p59, %p60
      %p62 = scmp.ne.s32.totalorder %s53, %s54
      %p63 = scmp.eq.s32.totalorder %s22, 0
      %p64 = por %p62, %p63
      %p65 = scmp.ne.s32.totalorder %s53, %s54
      %p66 = scmp.eq.s32.totalorder %s23, 1
      %p67 = por %p65, %p66
      %p69 = scmp.ne.s32.totalorder %s54, %s68
      %p70 = scmp.eq.s32.totalorder %s23, 0
      %p71 = por %p69, %p70
      %s73 = sadd.s32 %s72, 1
      %p76 = scmp.eq.s32.totalorder %s17, 1
      %p77 = scmp.ne.s32.totalorder %s72, %s74
      %p78 = scmp.eq.s32.totalorder %s17, 0
      %p79 = por %p77, %p78
      %p80 = scmp.ne.s32.totalorder %s72, %s74
      %p81 = scmp.eq.s32.totalorder %s22, 1
      %p82 = por %p80, %p81
      %p83 = scmp.ne.s32.totalorder %s74, %s75
      %p84 = scmp.eq.s32.totalorder %s22, 0
      %p85 = por %p83, %p84
      %p86 = scmp.ne.s32.totalorder %s74, %s75
      %p87 = scmp.eq.s32.totalorder %s23, 1
      %p88 = por %p86, %p87
      %p90 = scmp.ne.s32.totalorder %s75, %s89
      %p91 = scmp.eq.s32.totalorder %s23, 0
      %p92 = por %p90, %p91
      %s94 = sadd.s32 %s93, 1
      %p97 = scmp.eq.s32.totalorder %s17, 1
      %p98 = scmp.ne.s32.totalorder %s93, %s95
      %p99 = scmp.eq.s32.totalorder %s17, 0
      %p100 = por %p98, %p99
      %p101 = scmp.ne.s32.totalorder %s93, %s95
      %p102 = scmp.eq.s32.totalorder %s22, 1
      %p103 = por %p101, %p102
      %p104 = scmp.ne.s32.totalorder %s95, %s96
      %p105 = scmp.eq.s32.totalorder %s22, 0
      %p106 = por %p104, %p105
      %p107 = scmp.ne.s32.totalorder %s95, %s96
      %p108 = scmp.eq.s32.totalorder %s23, 1
      %p109 = por %p107, %p108
      %p111 = scmp.ne.s32.totalorder %s96, %s110
      %p112 = scmp.eq.s32.totalorder %s23, 0
      %p113 = por %p111, %p112
      %s114 = ssub.s32 %s17, %s24
      %p115 = scmp.eq.s32.totalorder %s114, 0
      %s117 = sadd.s32 %s116, 1
      %s118 = scalar_select %p115, %s116, %s117
      %p121 = pneg %p115
      %p122 = scmp.eq.s32.totalorder %s17, 1
      %p123 = por %p121, %p122
      %p124 = scmp.ne.s32.totalorder %s116, %s119
      %p125 = scmp.eq.s32.totalorder %s17, 0
      %p126 = por %p124, %p125
      %p127 = scmp.ne.s32.totalorder %s116, %s119
      %p128 = scmp.eq.s32.totalorder %s22, 1
      %p129 = por %p127, %p128
      %p130 = scmp.ne.s32.totalorder %s119, %s120
      %p131 = scmp.eq.s32.totalorder %s22, 0
      %p132 = por %p130, %p131
      %p133 = scmp.ne.s32.totalorder %s119, %s120
      %p134 = scmp.eq.s32.totalorder %s23, 1
      %p135 = por %p133, %p134
      %p137 = scmp.ne.s32.totalorder %s120, %s136
      %p138 = scmp.eq.s32.totalorder %s23, 0
      %p139 = por %p137, %p138
      %p140 = scmp.le.s32.totalorder 1, %s17
      %p141 = scmp.lt.s32.totalorder %s17, 3
      %p142 = pnand %p140, %p141
      %p143 = pneg %p142
      // Predicated region
      $region9: #{tpu_custom_call.1} parent=5 // pred_check
        _
      $region10: #{tpu_custom_call.1} parent=5 // pred_check_branch
        %145 = sbr.rel (%p142) target = $region12
      $region11: #{tpu_custom_call.1} parent=5 // pred_region
        %s146 = ssub.s32 %s17, 1
        // Predicated region
        $region13: #{tpu_custom_call.1} parent=11 // pred_check
          %p147 = pneg %p64
        $region14: #{tpu_custom_call.1} parent=11 // pred_check_branch
          %149 = sbr.rel (%p147) target = $region16
        $region15: #{tpu_custom_call.1} parent=11 // pred_region
          %s151 = ssub.s32 512, 512
          %152 = vsyncadd [#allocation6], %s151
          %s153 = sshll.u32 [#allocation5], 4
          %s154 = int_to_ptr.vmem [resolvable:$true] %s153
          %159 = dma.hbm_to_vmem [thread:$0]  %s1, 512, %s154, [#allocation6], 128, 128, 8
        $region16: #{tpu_custom_call.1} parent=11 // pred_fallthru
          _
        // Predicated region
        $region17: #{tpu_custom_call.1} parent=11 // pred_check
          %p160 = pneg %p85
        $region18: #{tpu_custom_call.1} parent=11 // pred_check_branch
          %162 = sbr.rel (%p160) target = $region20
        $region19: #{tpu_custom_call.1} parent=11 // pred_region
          %s164 = ssub.s32 512, 512
          %165 = vsyncadd [#allocation6], %s164
          %s166 = sshll.u32 [#allocation7], 4
          %s167 = int_to_ptr.vmem [resolvable:$true] %s166
          %172 = dma.hbm_to_vmem [thread:$0]  %s2, 512, %s167, [#allocation6], 128, 128, 8
        $region20: #{tpu_custom_call.1} parent=11 // pred_fallthru
          _
        // Predicated region
        $region21: #{tpu_custom_call.1} parent=11 // pred_check
          %p173 = pneg %p106
        $region22: #{tpu_custom_call.1} parent=11 // pred_check_branch
          %175 = sbr.rel (%p173) target = $region24
        $region23: #{tpu_custom_call.1} parent=11 // pred_region
          _
        $region24: #{tpu_custom_call.1} parent=11 // pred_fallthru
          _
      $region12: #{tpu_custom_call.1} parent=5 // pred_fallthru
        _
      %p176 = scmp.lt.s32.totalorder %s17, 2
      // Predicated region
      $region25: #{tpu_custom_call.1} parent=5 // pred_check
        %p177 = pneg %p176
      $region26: #{tpu_custom_call.1} parent=5 // pred_check_branch
        %179 = sbr.rel (%p177) target = $region28
      $region27: #{tpu_custom_call.1} parent=5 // pred_region
        // Predicated region
        $region29: #{tpu_custom_call.1} parent=27 // pred_check
          %p180 = pneg %p37
        $region30: #{tpu_custom_call.1} parent=27 // pred_check_branch
          %182 = sbr.rel (%p180) target = $region32
        $region31: #{tpu_custom_call.1} parent=27 // pred_region
          %s183 = sand.u32 %s27, 1
          %s184 = scalar_lea.sflag [#allocation3], %s183
          %s185 = sand.u32 %s27, 1
          %s186 = smul.addr %s185, 8
          %s187 = scalar_lea.vmem [#allocation2], %s186
          %s189 = ssub.s32 128, 128
          %190 = vsyncadd %s184, %s189
          %s191 = smul.addr %s17, 128
          %s192 = scalar_lea.hbm %s0, %s191
          %s194 = sshll.u32 %s187, 4
          %s195 = int_to_ptr.vmem [resolvable:$true] %s194
          %197 = dma.hbm_to_vmem [thread:$0]  %s192, 128, %s195, %s184
        $region32: #{tpu_custom_call.1} parent=27 // pred_fallthru
          _
      $region28: #{tpu_custom_call.1} parent=5 // pred_fallthru
        _
      %p198 = scmp.le.s32.totalorder 1, %s17
      %p199 = scmp.lt.s32.totalorder %s17, 3
      %p200 = pnand %p198, %p199
      %p201 = pneg %p200
      // Predicated region
      $region33: #{tpu_custom_call.1} parent=5 // pred_check
        _
      $region34: #{tpu_custom_call.1} parent=5 // pred_check_branch
        %203 = sbr.rel (%p200) target = $region36
      $region35: #{tpu_custom_call.1} parent=5 // pred_region
        %s204 = ssub.s32 %s17, 1
        %s205 = sand.u32 %s30, 1
        %s206 = scalar_lea.sflag [#allocation3], %s205
        %s207 = sand.u32 %s30, 1
        %s208 = smul.addr %s207, 8
        %s209 = scalar_lea.vmem [#allocation2], %s208
        // Predicated region
        $region37: #{tpu_custom_call.1} parent=35 // pred_check
          %p210 = pneg %p43
        $region38: #{tpu_custom_call.1} parent=35 // pred_check_branch
          %212 = sbr.rel (%p210) target = $region40
        $region39: #{tpu_custom_call.1} parent=35 // pred_region
          %213 = dma.done %s206, 128
        $region40: #{tpu_custom_call.1} parent=35 // pred_fallthru
          _
        // Predicated region
        $region41: #{tpu_custom_call.1} parent=35 // pred_check
          %p214 = pneg %p64
        $region42: #{tpu_custom_call.1} parent=35 // pred_check_branch
          %216 = sbr.rel (%p214) target = $region44
        $region43: #{tpu_custom_call.1} parent=35 // pred_region
          %217 = dma.done [#allocation6], 512
        $region44: #{tpu_custom_call.1} parent=35 // pred_fallthru
          _
        // Predicated region
        $region45: #{tpu_custom_call.1} parent=35 // pred_check
          %p218 = pneg %p85
        $region46: #{tpu_custom_call.1} parent=35 // pred_check_branch
          %220 = sbr.rel (%p218) target = $region48
        $region47: #{tpu_custom_call.1} parent=35 // pred_region
          %221 = dma.done [#allocation6], 512
        $region48: #{tpu_custom_call.1} parent=35 // pred_fallthru
          _
        %s222 = sand.u32 %s30, 1
        %s223 = scalar_lea.sflag [#allocation3], %s222
        %s224 = sand.u32 %s30, 1
        %s225 = smul.addr %s224, 8
        %s226 = scalar_lea.vmem [#allocation2], %s225
        %p227 = pneg %p43
        %p228 = pneg %p40
        %p229 = pneg %p64
        %p230 = pneg %p61
        %p231 = pneg %p85
        %p232 = pneg %p82
        %p233 = pneg %p106
        %p234 = pneg %p103
        %p235 = pneg %p132
        %p236 = pneg %p129
        %s237 = sand.u32 %s119, 1
        %s238 = scalar_lea.sflag [#allocation4], %s237
        %s239 = sand.u32 %s119, 1
        %s240 = smul.addr %s239, 8
        %s241 = scalar_lea.vmem [#allocation8], %s240
        %v242 = vld [vmem:[%s209] sm:$0xff]
        %v243 = vld [vmem:[#allocation5] sm:$0xff]
        %v244 = vld [vmem:[#allocation5 + $0x8] sm:$0xff]
        %v245 = vld [vmem:[#allocation5 + $0x10] sm:$0xff]
        %v246 = vld [vmem:[#allocation5 + $0x18] sm:$0xff]
        %vm247 = vcmask 261120
        %v249 = vsel %vm247, %v242, 0
        %251 = vmatprep.subr.mxu0 0.0
        %252 = vmatpush1.msra.mxu0 %v243
        %253 = vmatprep.subr.mxu0 0.0
        %254 = vmatpush1.msra.mxu0 %v244
        %255 = vmatprep.subr.mxu0 0.0
        %256 = vmatpush1.msra.mxu0 %v245
        %257 = vmatprep.subr.mxu0 0.0
        %258 = vmatpush1.msra.mxu0 %v246
        %259 = vmatprep.subr.mxu0 0.0
        %260 = vmatpush1.msra.mxu0 0.0
        %261 = vmatprep.subr.mxu0 0.0
        %262 = vmatpush1.msra.mxu0 0.0
        %263 = vmatprep.subr.mxu0 0.0
        %264 = vmatpush1.msra.mxu0 0.0
        %265 = vmatprep.subr.mxu0 0.0
        %266 = vmatpush1.msra.mxu0 0.0
        %267 = vmatprep.subr.mxu0 0.0
        %268 = vmatpush1.msra.mxu0 0.0
        %269 = vmatprep.subr.mxu0 0.0
        %270 = vmatpush1.msra.mxu0 0.0
        %271 = vmatprep.subr.mxu0 0.0
        %272 = vmatpush1.msra.mxu0 0.0
        %273 = vmatprep.subr.mxu0 0.0
        %274 = vmatpush1.msra.mxu0 0.0
        %275 = vmatprep.subr.mxu0 0.0
        %276 = vmatpush1.msra.mxu0 0.0
        %277 = vmatprep.subr.mxu0 0.0
        %278 = vmatpush1.msra.mxu0 0.0
        %279 = vmatprep.subr.mxu0 0.0
        %280 = vmatpush1.msra.mxu0 0.0
        %281 = vmatprep.subr.mxu0 0.0
        %282 = vmatpush1.msra.mxu0 0.0
        %283 = vmatprep.subr.mxu0 0.0
        %284 = vmatpush1.msra.mxu0 0.0
        %285 = vmatprep.subr.mxu0 0.0
        %286 = vmatpush1.msra.mxu0 0.0
        %287 = vmatprep.subr.mxu0 0.0
        %288 = vmatpush1.msra.mxu0 0.0
        %289 = vmatprep.subr.mxu0 0.0
        %290 = vmatpush1.msra.mxu0 0.0
        %291 = vmatprep.subr.mxu0 0.0
        %292 = vmatpush1.msra.mxu0 0.0
        %293 = vmatprep.subr.mxu0 0.0
        %294 = vmatpush1.msra.mxu0 0.0
        %295 = vmatprep.subr.mxu0 0.0
        %296 = vmatpush1.msra.mxu0 0.0
        %297 = vmatprep.subr.mxu0 0.0
        %298 = vmatpush1.msra.mxu0 0.0
        %299 = vmatprep.subr.mxu0 0.0
        %300 = vmatpush1.msra.mxu0 0.0
        %301 = vmatprep.subr.mxu0 0.0
        %302 = vmatpush1.msra.mxu0 0.0
        %303 = vmatprep.subr.mxu0 0.0
        %304 = vmatpush1.msra.mxu0 0.0
        %305 = vmatprep.subr.mxu0 0.0
        %306 = vmatpush1.msra.mxu0 0.0
        %307 = vmatprep.subr.mxu0 0.0
        %308 = vmatpush1.msra.mxu0 0.0
        %309 = vmatprep.subr.mxu0 0.0
        %310 = vmatpush1.msra.mxu0 0.0
        %311 = vmatprep.subr.mxu0 0.0
        %312 = vmatpush1.msra.mxu0 0.0
        %313 = vmatprep.subr.mxu0 0.0
        %314 = vmatpush1.msra.mxu0 0.0
        %315 = vmatprep.mubr.f32.mxu0 0.0
        %316 = vmatmul.mubr.f32.gmra.mrb[0].mxu0 %v249
        %v317 = vpop.f32.mrb[0].mxu0
        %v318 = vadd.f32 0.0, %v317
        %v319 = vpop.f32.mrb[0].mxu0
        %320 = vdwg.mxu0
        %v321 = vmul.f32 %v318, 0.35355338
        %323 = vrot.lane.b32.xlu0 %v321, 120
        %v324 = vpop.permute.xlu0 %323
        %326 = vrot.lane.b32.xlu0 %v321, 112
        %v327 = vpop.permute.xlu0 %326
        %329 = vrot.lane.b32.xlu0 %v321, 104
        %v330 = vpop.permute.xlu0 %329
        %v332 = vcombine.low %v321, %v327
        %v333 = vcombine.high %v321, %v327
        %v335 = vunpack.c.l.s4 1983009808
        %v336 = vunpack.c.0.s8 %v335
        %v337 = vlaneseq
        %v338 = vshrl.u32 %v337, 7
        %v339 = vsub.s32 %v336, %v338
        %v340 = vrot.slane %v332, %v339
        %v342 = vunpack.c.l.s4 1983009808
        %v343 = vunpack.c.0.s8 %v342
        %v344 = vlaneseq
        %v345 = vshrl.u32 %v344, 7
        %v346 = vsub.s32 %v343, %v345
        %v347 = vrot.slane %v333, %v346
        %v348 = vcombine.low %v324, %v330
        %v349 = vcombine.high %v324, %v330
        %v351 = vunpack.c.l.s4 1983009808
        %v352 = vunpack.c.0.s8 %v351
        %v353 = vlaneseq
        %v354 = vshrl.u32 %v353, 7
        %v355 = vsub.s32 %v352, %v354
        %v356 = vrot.slane %v348, %v355
        %v358 = vunpack.c.l.s4 1983009808
        %v359 = vunpack.c.0.s8 %v358
        %v360 = vlaneseq
        %v361 = vshrl.u32 %v360, 7
        %v362 = vsub.s32 %v359, %v361
        %v363 = vrot.slane %v349, %v362
        %v364 = vcombine.low %v340, %v356
        %v365 = vcombine.high %v340, %v356
        %v367 = vunpack.c.l.s4 1934713408
        %v368 = vunpack.c.0.s8 %v367
        %v369 = vlaneseq
        %v370 = vshrl.u32 %v369, 7
        %v371 = vsub.s32 %v368, %v370
        %v372 = vrot.slane %v364, %v371
        %v374 = vunpack.c.l.s4 1934713408
        %v375 = vunpack.c.0.s8 %v374
        %v376 = vlaneseq
        %v377 = vshrl.u32 %v376, 7
        %v378 = vsub.s32 %v375, %v377
        %v379 = vrot.slane %v365, %v378
        %v380 = vcombine.low %v347, %v363
        %v381 = vcombine.high %v347, %v363
        %v383 = vunpack.c.l.s4 1934713408
        %v384 = vunpack.c.0.s8 %v383
        %v385 = vlaneseq
        %v386 = vshrl.u32 %v385, 7
        %v387 = vsub.s32 %v384, %v386
        %v388 = vrot.slane %v380, %v387
        %v390 = vunpack.c.l.s4 1934713408
        %v391 = vunpack.c.0.s8 %v390
        %v392 = vlaneseq
        %v393 = vshrl.u32 %v392, 7
        %v394 = vsub.s32 %v391, %v393
        %v395 = vrot.slane %v381, %v394
        %v396 = vcombine.high %v372, 0.0
        %v397 = vcombine.high %v379, 0.0
        %v398 = vcombine.high %v388, 0.0
        %v399 = vcombine.high %v395, 0.0
        %v400 = vcombine.low %v372, %v379
        %v402 = vunpack.c.l.s4 1983009808
        %v403 = vunpack.c.0.s8 %v402
        %v404 = vlaneseq
        %v405 = vshrl.u32 %v404, 7
        %v406 = vsub.s32 %v403, %v405
        %v407 = vrot.slane %v400, %v406
        %v408 = vcombine.low %v396, %v397
        %v410 = vunpack.c.l.s4 1983009808
        %v411 = vunpack.c.0.s8 %v410
        %v412 = vlaneseq
        %v413 = vshrl.u32 %v412, 7
        %v414 = vsub.s32 %v411, %v413
        %v415 = vrot.slane %v408, %v414
        %v416 = vcombine.low %v388, %v395
        %v418 = vunpack.c.l.s4 1983009808
        %v419 = vunpack.c.0.s8 %v418
        %v420 = vlaneseq
        %v421 = vshrl.u32 %v420, 7
        %v422 = vsub.s32 %v419, %v421
        %v423 = vrot.slane %v416, %v422
        %v424 = vcombine.low %v398, %v399
        %v426 = vunpack.c.l.s4 1983009808
        %v427 = vunpack.c.0.s8 %v426
        %v428 = vlaneseq
        %v429 = vshrl.u32 %v428, 7
        %v430 = vsub.s32 %v427, %v429
        %v431 = vrot.slane %v424, %v430
        %v432 = vcombine.low %v407, %v415
        %v433 = vcombine.high %v407, %v415
        %v435 = vunpack.c.l.s4 1934713408
        %v436 = vunpack.c.0.s8 %v435
        %v437 = vlaneseq
        %v438 = vshrl.u32 %v437, 7
        %v439 = vsub.s32 %v436, %v438
        %v440 = vrot.slane %v432, %v439
        %v442 = vunpack.c.l.s4 1934713408
        %v443 = vunpack.c.0.s8 %v442
        %v444 = vlaneseq
        %v445 = vshrl.u32 %v444, 7
        %v446 = vsub.s32 %v443, %v445
        %v447 = vrot.slane %v433, %v446
        %v448 = vcombine.low %v423, %v431
        %v449 = vcombine.high %v423, %v431
        %v451 = vunpack.c.l.s4 1934713408
        %v452 = vunpack.c.0.s8 %v451
        %v453 = vlaneseq
        %v454 = vshrl.u32 %v453, 7
        %v455 = vsub.s32 %v452, %v454
        %v456 = vrot.slane %v448, %v455
        %v458 = vunpack.c.l.s4 1934713408
        %v459 = vunpack.c.0.s8 %v458
        %v460 = vlaneseq
        %v461 = vshrl.u32 %v460, 7
        %v462 = vsub.s32 %v459, %v461
        %v463 = vrot.slane %v449, %v462
        %v464 = vcombine.low %v440, %v456
        %v465 = vcombine.high %v440, %v456
        %v466 = vcombine.low %v447, %v463
        %v467 = vcombine.high %v447, %v463
        %469 = vrot.lane.b32.xlu0 %v318, 120
        %v470 = vpop.permute.xlu0 %469
        %471 = vrot.lane.b32.xlu0 %v318, 112
        %v472 = vpop.permute.xlu0 %471
        %473 = vrot.lane.b32.xlu0 %v318, 104
        %v474 = vpop.permute.xlu0 %473
        %475 = vrot.lane.b32.xlu0 %v318, 96
        %v476 = vpop.permute.xlu0 %475
        %477 = vrot.lane.b32.xlu0 %v470, 96
        %v478 = vpop.permute.xlu0 %477
        %479 = vrot.lane.b32.xlu0 %v472, 96
        %v480 = vpop.permute.xlu0 %479
        %481 = vrot.lane.b32.xlu0 %v474, 96
        %v482 = vpop.permute.xlu0 %481
        %v487 = vcombine.low %v476, %v480
        %v488 = vcombine.high %v476, %v480
        %v490 = vunpack.c.l.s4 1983009808
        %v491 = vunpack.c.0.s8 %v490
        %v492 = vlaneseq
        %v493 = vshrl.u32 %v492, 7
        %v494 = vsub.s32 %v491, %v493
        %v495 = vrot.slane %v487, %v494
        %v497 = vunpack.c.l.s4 1983009808
        %v498 = vunpack.c.0.s8 %v497
        %v499 = vlaneseq
        %v500 = vshrl.u32 %v499, 7
        %v501 = vsub.s32 %v498, %v500
        %v502 = vrot.slane %v488, %v501
        %v503 = vcombine.low %v478, %v482
        %v504 = vcombine.high %v478, %v482
        %v506 = vunpack.c.l.s4 1983009808
        %v507 = vunpack.c.0.s8 %v506
        %v508 = vlaneseq
        %v509 = vshrl.u32 %v508, 7
        %v510 = vsub.s32 %v507, %v509
        %v511 = vrot.slane %v503, %v510
        %v513 = vunpack.c.l.s4 1983009808
        %v514 = vunpack.c.0.s8 %v513
        %v515 = vlaneseq
        %v516 = vshrl.u32 %v515, 7
        %v517 = vsub.s32 %v514, %v516
        %v518 = vrot.slane %v504, %v517
        %v519 = vcombine.low %v495, %v511
        %v520 = vcombine.high %v495, %v511
        %v522 = vunpack.c.l.s4 1934713408
        %v523 = vunpack.c.0.s8 %v522
        %v524 = vlaneseq
        %v525 = vshrl.u32 %v524, 7
        %v526 = vsub.s32 %v523, %v525
        %v527 = vrot.slane %v519, %v526
        %v529 = vunpack.c.l.s4 1934713408
        %v530 = vunpack.c.0.s8 %v529
        %v531 = vlaneseq
        %v532 = vshrl.u32 %v531, 7
        %v533 = vsub.s32 %v530, %v532
        %v534 = vrot.slane %v520, %v533
        %v535 = vcombine.low %v502, %v518
        %v536 = vcombine.high %v502, %v518
        %v538 = vunpack.c.l.s4 1934713408
        %v539 = vunpack.c.0.s8 %v538
        %v540 = vlaneseq
        %v541 = vshrl.u32 %v540, 7
        %v542 = vsub.s32 %v539, %v541
        %v543 = vrot.slane %v535, %v542
        %v545 = vunpack.c.l.s4 1934713408
        %v546 = vunpack.c.0.s8 %v545
        %v547 = vlaneseq
        %v548 = vshrl.u32 %v547, 7
        %v549 = vsub.s32 %v546, %v548
        %v550 = vrot.slane %v536, %v549
        %v551 = vcombine.high %v527, 0.0
        %v552 = vcombine.high %v534, 0.0
        %v553 = vcombine.high %v543, 0.0
        %v554 = vcombine.high %v550, 0.0
        %v555 = vcombine.low %v527, %v534
        %v557 = vunpack.c.l.s4 1983009808
        %v558 = vunpack.c.0.s8 %v557
        %v559 = vlaneseq
        %v560 = vshrl.u32 %v559, 7
        %v561 = vsub.s32 %v558, %v560
        %v562 = vrot.slane %v555, %v561
        %v563 = vcombine.low %v551, %v552
        %v565 = vunpack.c.l.s4 1983009808
        %v566 = vunpack.c.0.s8 %v565
        %v567 = vlaneseq
        %v568 = vshrl.u32 %v567, 7
        %v569 = vsub.s32 %v566, %v568
        %v570 = vrot.slane %v563, %v569
        %v571 = vcombine.low %v543, %v550
        %v573 = vunpack.c.l.s4 1983009808
        %v574 = vunpack.c.0.s8 %v573
        %v575 = vlaneseq
        %v576 = vshrl.u32 %v575, 7
        %v577 = vsub.s32 %v574, %v576
        %v578 = vrot.slane %v571, %v577
        %v579 = vcombine.low %v553, %v554
        %v581 = vunpack.c.l.s4 1983009808
        %v582 = vunpack.c.0.s8 %v581
        %v583 = vlaneseq
        %v584 = vshrl.u32 %v583, 7
        %v585 = vsub.s32 %v582, %v584
        %v586 = vrot.slane %v579, %v585
        %v587 = vcombine.low %v562, %v570
        %v588 = vcombine.high %v562, %v570
        %v590 = vunpack.c.l.s4 1934713408
        %v591 = vunpack.c.0.s8 %v590
        %v592 = vlaneseq
        %v593 = vshrl.u32 %v592, 7
        %v594 = vsub.s32 %v591, %v593
        %v595 = vrot.slane %v587, %v594
        %v597 = vunpack.c.l.s4 1934713408
        %v598 = vunpack.c.0.s8 %v597
        %v599 = vlaneseq
        %v600 = vshrl.u32 %v599, 7
        %v601 = vsub.s32 %v598, %v600
        %v602 = vrot.slane %v588, %v601
        %v603 = vcombine.low %v578, %v586
        %v604 = vcombine.high %v578, %v586
        %v606 = vunpack.c.l.s4 1934713408
        %v607 = vunpack.c.0.s8 %v606
        %v608 = vlaneseq
        %v609 = vshrl.u32 %v608, 7
        %v610 = vsub.s32 %v607, %v609
        %v611 = vrot.slane %v603, %v610
        %v613 = vunpack.c.l.s4 1934713408
        %v614 = vunpack.c.0.s8 %v613
        %v615 = vlaneseq
        %v616 = vshrl.u32 %v615, 7
        %v617 = vsub.s32 %v614, %v616
        %v618 = vrot.slane %v604, %v617
        %v619 = vcombine.low %v595, %v611
        %v620 = vcombine.high %v595, %v611
        %v621 = vcombine.low %v602, %v618
        %v622 = vcombine.high %v602, %v618
        %623 = vrot.lane.b32.xlu0 %v318, 64
        %v624 = vpop.permute.xlu0 %623
        %625 = vrot.lane.b32.xlu0 %v470, 64
        %v626 = vpop.permute.xlu0 %625
        %627 = vrot.lane.b32.xlu0 %v472, 64
        %v628 = vpop.permute.xlu0 %627
        %629 = vrot.lane.b32.xlu0 %v474, 64
        %v630 = vpop.permute.xlu0 %629
        %v635 = vcombine.low %v624, %v628
        %v636 = vcombine.high %v624, %v628
        %v638 = vunpack.c.l.s4 1983009808
        %v639 = vunpack.c.0.s8 %v638
        %v640 = vlaneseq
        %v641 = vshrl.u32 %v640, 7
        %v642 = vsub.s32 %v639, %v641
        %v643 = vrot.slane %v635, %v642
        %v645 = vunpack.c.l.s4 1983009808
        %v646 = vunpack.c.0.s8 %v645
        %v647 = vlaneseq
        %v648 = vshrl.u32 %v647, 7
        %v649 = vsub.s32 %v646, %v648
        %v650 = vrot.slane %v636, %v649
        %v651 = vcombine.low %v626, %v630
        %v652 = vcombine.high %v626, %v630
        %v654 = vunpack.c.l.s4 1983009808
        %v655 = vunpack.c.0.s8 %v654
        %v656 = vlaneseq
        %v657 = vshrl.u32 %v656, 7
        %v658 = vsub.s32 %v655, %v657
        %v659 = vrot.slane %v651, %v658
        %v661 = vunpack.c.l.s4 1983009808
        %v662 = vunpack.c.0.s8 %v661
        %v663 = vlaneseq
        %v664 = vshrl.u32 %v663, 7
        %v665 = vsub.s32 %v662, %v664
        %v666 = vrot.slane %v652, %v665
        %v667 = vcombine.low %v643, %v659
        %v668 = vcombine.high %v643, %v659
        %v670 = vunpack.c.l.s4 1934713408
        %v671 = vunpack.c.0.s8 %v670
        %v672 = vlaneseq
        %v673 = vshrl.u32 %v672, 7
        %v674 = vsub.s32 %v671, %v673
        %v675 = vrot.slane %v667, %v674
        %v677 = vunpack.c.l.s4 1934713408
        %v678 = vunpack.c.0.s8 %v677
        %v679 = vlaneseq
        %v680 = vshrl.u32 %v679, 7
        %v681 = vsub.s32 %v678, %v680
        %v682 = vrot.slane %v668, %v681
        %v683 = vcombine.low %v650, %v666
        %v684 = vcombine.high %v650, %v666
        %v686 = vunpack.c.l.s4 1934713408
        %v687 = vunpack.c.0.s8 %v686
        %v688 = vlaneseq
        %v689 = vshrl.u32 %v688, 7
        %v690 = vsub.s32 %v687, %v689
        %v691 = vrot.slane %v683, %v690
        %v693 = vunpack.c.l.s4 1934713408
        %v694 = vunpack.c.0.s8 %v693
        %v695 = vlaneseq
        %v696 = vshrl.u32 %v695, 7
        %v697 = vsub.s32 %v694, %v696
        %v698 = vrot.slane %v684, %v697
        %v699 = vcombine.high %v675, 0.0
        %v700 = vcombine.high %v682, 0.0
        %v701 = vcombine.high %v691, 0.0
        %v702 = vcombine.high %v698, 0.0
        %v703 = vcombine.low %v675, %v682
        %v705 = vunpack.c.l.s4 1983009808
        %v706 = vunpack.c.0.s8 %v705
        %v707 = vlaneseq
        %v708 = vshrl.u32 %v707, 7
        %v709 = vsub.s32 %v706, %v708
        %v710 = vrot.slane %v703, %v709
        %v711 = vcombine.low %v699, %v700
        %v713 = vunpack.c.l.s4 1983009808
        %v714 = vunpack.c.0.s8 %v713
        %v715 = vlaneseq
        %v716 = vshrl.u32 %v715, 7
        %v717 = vsub.s32 %v714, %v716
        %v718 = vrot.slane %v711, %v717
        %v719 = vcombine.low %v691, %v698
        %v721 = vunpack.c.l.s4 1983009808
        %v722 = vunpack.c.0.s8 %v721
        %v723 = vlaneseq
        %v724 = vshrl.u32 %v723, 7
        %v725 = vsub.s32 %v722, %v724
        %v726 = vrot.slane %v719, %v725
        %v727 = vcombine.low %v701, %v702
        %v729 = vunpack.c.l.s4 1983009808
        %v730 = vunpack.c.0.s8 %v729
        %v731 = vlaneseq
        %v732 = vshrl.u32 %v731, 7
        %v733 = vsub.s32 %v730, %v732
        %v734 = vrot.slane %v727, %v733
        %v735 = vcombine.low %v710, %v718
        %v736 = vcombine.high %v710, %v718
        %v738 = vunpack.c.l.s4 1934713408
        %v739 = vunpack.c.0.s8 %v738
        %v740 = vlaneseq
        %v741 = vshrl.u32 %v740, 7
        %v742 = vsub.s32 %v739, %v741
        %v743 = vrot.slane %v735, %v742
        %v745 = vunpack.c.l.s4 1934713408
        %v746 = vunpack.c.0.s8 %v745
        %v747 = vlaneseq
        %v748 = vshrl.u32 %v747, 7
        %v749 = vsub.s32 %v746, %v748
        %v750 = vrot.slane %v736, %v749
        %v751 = vcombine.low %v726, %v734
        %v752 = vcombine.high %v726, %v734
        %v754 = vunpack.c.l.s4 1934713408
        %v755 = vunpack.c.0.s8 %v754
        %v756 = vlaneseq
        %v757 = vshrl.u32 %v756, 7
        %v758 = vsub.s32 %v755, %v757
        %v759 = vrot.slane %v751, %v758
        %v761 = vunpack.c.l.s4 1934713408
        %v762 = vunpack.c.0.s8 %v761
        %v763 = vlaneseq
        %v764 = vshrl.u32 %v763, 7
        %v765 = vsub.s32 %v762, %v764
        %v766 = vrot.slane %v752, %v765
        %v767 = vcombine.low %v743, %v759
        %v768 = vcombine.high %v743, %v759
        %v769 = vcombine.low %v750, %v766
        %v770 = vcombine.high %v750, %v766
        %vm771 = vcmask 64512
        %v773 = vsel %vm771, %v464, 0
        %v776 = vsel %vm771, %v619, 0
        %778 = vmatprep.subr.mxu0 0.0
        %779 = vmatpush1.xpose.msra.mxu0 %v776
        %780 = vmatprep.subr.mxu0 0.0
        %781 = vmatpush1.xpose.msra.mxu0 0.0
        %782 = vmatprep.subr.mxu0 0.0
        %783 = vmatpush1.xpose.msra.mxu0 0.0
        %784 = vmatprep.subr.mxu0 0.0
        %785 = vmatpush1.xpose.msra.mxu0 0.0
        %786 = vmatprep.subr.mxu0 0.0
        %787 = vmatpush1.xpose.msra.mxu0 0.0
        %788 = vmatprep.subr.mxu0 0.0
        %789 = vmatpush1.xpose.msra.mxu0 0.0
        %790 = vmatprep.subr.mxu0 0.0
        %791 = vmatpush1.xpose.msra.mxu0 0.0
        %792 = vmatprep.subr.mxu0 0.0
        %793 = vmatpush1.xpose.msra.mxu0 0.0
        %794 = vmatprep.subr.mxu0 0.0
        %795 = vmatpush1.xpose.msra.mxu0 0.0
        %796 = vmatprep.subr.mxu0 0.0
        %797 = vmatpush1.xpose.msra.mxu0 0.0
        %798 = vmatprep.subr.mxu0 0.0
        %799 = vmatpush1.xpose.msra.mxu0 0.0
        %800 = vmatprep.subr.mxu0 0.0
        %801 = vmatpush1.xpose.msra.mxu0 0.0
        %802 = vmatprep.subr.mxu0 0.0
        %803 = vmatpush1.xpose.msra.mxu0 0.0
        %804 = vmatprep.subr.mxu0 0.0
        %805 = vmatpush1.xpose.msra.mxu0 0.0
        %806 = vmatprep.subr.mxu0 0.0
        %807 = vmatpush1.xpose.msra.mxu0 0.0
        %808 = vmatprep.subr.mxu0 0.0
        %809 = vmatpush1.xpose.msra.mxu0 0.0
        %810 = vmatprep.subr.mxu0 0.0
        %811 = vmatpush1.xpose.msra.mxu0 0.0
        %812 = vmatprep.subr.mxu0 0.0
        %813 = vmatpush1.xpose.msra.mxu0 0.0
        %814 = vmatprep.subr.mxu0 0.0
        %815 = vmatpush1.xpose.msra.mxu0 0.0
        %816 = vmatprep.subr.mxu0 0.0
        %817 = vmatpush1.xpose.msra.mxu0 0.0
        %818 = vmatprep.subr.mxu0 0.0
        %819 = vmatpush1.xpose.msra.mxu0 0.0
        %820 = vmatprep.subr.mxu0 0.0
        %821 = vmatpush1.xpose.msra.mxu0 0.0
        %822 = vmatprep.subr.mxu0 0.0
        %823 = vmatpush1.xpose.msra.mxu0 0.0
        %824 = vmatprep.subr.mxu0 0.0
        %825 = vmatpush1.xpose.msra.mxu0 0.0
        %826 = vmatprep.subr.mxu0 0.0
        %827 = vmatpush1.xpose.msra.mxu0 0.0
        %828 = vmatprep.subr.mxu0 0.0
        %829 = vmatpush1.xpose.msra.mxu0 0.0
        %830 = vmatprep.subr.mxu0 0.0
        %831 = vmatpush1.xpose.msra.mxu0 0.0
        %832 = vmatprep.subr.mxu0 0.0
        %833 = vmatpush1.xpose.msra.mxu0 0.0
        %834 = vmatprep.subr.mxu0 0.0
        %835 = vmatpush1.xpose.msra.mxu0 0.0
        %836 = vmatprep.subr.mxu0 0.0
        %837 = vmatpush1.xpose.msra.mxu0 0.0
        %838 = vmatprep.subr.mxu0 0.0
        %839 = vmatpush1.xpose.msra.mxu0 0.0
        %840 = vmatprep.subr.mxu0 0.0
        %841 = vmatpush1.xpose.msra.mxu0 0.0
        %842 = vmatprep.mubr.f32.mxu0 0.0
        %843 = vmatmul.mubr.f32.gmra.mrb[0].mxu0 %v773
        %v844 = vpop.f32.mrb[0].mxu0
        %v845 = vadd.f32 0.0, %v844
        %v846 = vpop.f32.mrb[0].mxu0
        %847 = vdwg.mxu0
        %v849 = vsel %vm771, %v465, 0
        %v852 = vsel %vm771, %v620, 0
        %854 = vmatprep.subr.mxu0 0.0
        %855 = vmatpush1.xpose.msra.mxu0 %v852
        %856 = vmatprep.subr.mxu0 0.0
        %857 = vmatpush1.xpose.msra.mxu0 0.0
        %858 = vmatprep.subr.mxu0 0.0
        %859 = vmatpush1.xpose.msra.mxu0 0.0
        %860 = vmatprep.subr.mxu0 0.0
        %861 = vmatpush1.xpose.msra.mxu0 0.0
        %862 = vmatprep.subr.mxu0 0.0
        %863 = vmatpush1.xpose.msra.mxu0 0.0
        %864 = vmatprep.subr.mxu0 0.0
        %865 = vmatpush1.xpose.msra.mxu0 0.0
        %866 = vmatprep.subr.mxu0 0.0
        %867 = vmatpush1.xpose.msra.mxu0 0.0
        %868 = vmatprep.subr.mxu0 0.0
        %869 = vmatpush1.xpose.msra.mxu0 0.0
        %870 = vmatprep.subr.mxu0 0.0
        %871 = vmatpush1.xpose.msra.mxu0 0.0
        %872 = vmatprep.subr.mxu0 0.0
        %873 = vmatpush1.xpose.msra.mxu0 0.0
        %874 = vmatprep.subr.mxu0 0.0
        %875 = vmatpush1.xpose.msra.mxu0 0.0
        %876 = vmatprep.subr.mxu0 0.0
        %877 = vmatpush1.xpose.msra.mxu0 0.0
        %878 = vmatprep.subr.mxu0 0.0
        %879 = vmatpush1.xpose.msra.mxu0 0.0
        %880 = vmatprep.subr.mxu0 0.0
        %881 = vmatpush1.xpose.msra.mxu0 0.0
        %882 = vmatprep.subr.mxu0 0.0
        %883 = vmatpush1.xpose.msra.mxu0 0.0
        %884 = vmatprep.subr.mxu0 0.0
        %885 = vmatpush1.xpose.msra.mxu0 0.0
        %886 = vmatprep.subr.mxu0 0.0
        %887 = vmatpush1.xpose.msra.mxu0 0.0
        %888 = vmatprep.subr.mxu0 0.0
        %889 = vmatpush1.xpose.msra.mxu0 0.0
        %890 = vmatprep.subr.mxu0 0.0
        %891 = vmatpush1.xpose.msra.mxu0 0.0
        %892 = vmatprep.subr.mxu0 0.0
        %893 = vmatpush1.xpose.msra.mxu0 0.0
        %894 = vmatprep.subr.mxu0 0.0
        %895 = vmatpush1.xpose.msra.mxu0 0.0
        %896 = vmatprep.subr.mxu0 0.0
        %897 = vmatpush1.xpose.msra.mxu0 0.0
        %898 = vmatprep.subr.mxu0 0.0
        %899 = vmatpush1.xpose.msra.mxu0 0.0
        %900 = vmatprep.subr.mxu0 0.0
        %901 = vmatpush1.xpose.msra.mxu0 0.0
        %902 = vmatprep.subr.mxu0 0.0
        %903 = vmatpush1.xpose.msra.mxu0 0.0
        %904 = vmatprep.subr.mxu0 0.0
        %905 = vmatpush1.xpose.msra.mxu0 0.0
        %906 = vmatprep.subr.mxu0 0.0
        %907 = vmatpush1.xpose.msra.mxu0 0.0
        %908 = vmatprep.subr.mxu0 0.0
        %909 = vmatpush1.xpose.msra.mxu0 0.0
        %910 = vmatprep.subr.mxu0 0.0
        %911 = vmatpush1.xpose.msra.mxu0 0.0
        %912 = vmatprep.subr.mxu0 0.0
        %913 = vmatpush1.xpose.msra.mxu0 0.0
        %914 = vmatprep.subr.mxu0 0.0
        %915 = vmatpush1.xpose.msra.mxu0 0.0
        %916 = vmatprep.subr.mxu0 0.0
        %917 = vmatpush1.xpose.msra.mxu0 0.0
        %918 = vmatprep.mubr.f32.mxu0 0.0
        %919 = vmatmul.mubr.f32.gmra.mrb[0].mxu0 %v849
        %v920 = vpop.f32.mrb[0].mxu0
        %v921 = vadd.f32 0.0, %v920
        %v922 = vpop.f32.mrb[0].mxu0
        %923 = vdwg.mxu0
        %v925 = vsel %vm771, %v466, 0
        %v928 = vsel %vm771, %v621, 0
        %930 = vmatprep.subr.mxu0 0.0
        %931 = vmatpush1.xpose.msra.mxu0 %v928
        %932 = vmatprep.subr.mxu0 0.0
        %933 = vmatpush1.xpose.msra.mxu0 0.0
        %934 = vmatprep.subr.mxu0 0.0
        %935 = vmatpush1.xpose.msra.mxu0 0.0
        %936 = vmatprep.subr.mxu0 0.0
        %937 = vmatpush1.xpose.msra.mxu0 0.0
        %938 = vmatprep.subr.mxu0 0.0
        %939 = vmatpush1.xpose.msra.mxu0 0.0
        %940 = vmatprep.subr.mxu0 0.0
        %941 = vmatpush1.xpose.msra.mxu0 0.0
        %942 = vmatprep.subr.mxu0 0.0
        %943 = vmatpush1.xpose.msra.mxu0 0.0
        %944 = vmatprep.subr.mxu0 0.0
        %945 = vmatpush1.xpose.msra.mxu0 0.0
        %946 = vmatprep.subr.mxu0 0.0
        %947 = vmatpush1.xpose.msra.mxu0 0.0
        %948 = vmatprep.subr.mxu0 0.0
        %949 = vmatpush1.xpose.msra.mxu0 0.0
        %950 = vmatprep.subr.mxu0 0.0
        %951 = vmatpush1.xpose.msra.mxu0 0.0
        %952 = vmatprep.subr.mxu0 0.0
        %953 = vmatpush1.xpose.msra.mxu0 0.0
        %954 = vmatprep.subr.mxu0 0.0
        %955 = vmatpush1.xpose.msra.mxu0 0.0
        %956 = vmatprep.subr.mxu0 0.0
        %957 = vmatpush1.xpose.msra.mxu0 0.0
        %958 = vmatprep.subr.mxu0 0.0
        %959 = vmatpush1.xpose.msra.mxu0 0.0
        %960 = vmatprep.subr.mxu0 0.0
        %961 = vmatpush1.xpose.msra.mxu0 0.0
        %962 = vmatprep.subr.mxu0 0.0
        %963 = vmatpush1.xpose.msra.mxu0 0.0
        %964 = vmatprep.subr.mxu0 0.0
        %965 = vmatpush1.xpose.msra.mxu0 0.0
        %966 = vmatprep.subr.mxu0 0.0
        %967 = vmatpush1.xpose.msra.mxu0 0.0
        %968 = vmatprep.subr.mxu0 0.0
        %969 = vmatpush1.xpose.msra.mxu0 0.0
        %970 = vmatprep.subr.mxu0 0.0
        %971 = vmatpush1.xpose.msra.mxu0 0.0
        %972 = vmatprep.subr.mxu0 0.0
        %973 = vmatpush1.xpose.msra.mxu0 0.0
        %974 = vmatprep.subr.mxu0 0.0
        %975 = vmatpush1.xpose.msra.mxu0 0.0
        %976 = vmatprep.subr.mxu0 0.0
        %977 = vmatpush1.xpose.msra.mxu0 0.0
        %978 = vmatprep.subr.mxu0 0.0
        %979 = vmatpush1.xpose.msra.mxu0 0.0
        %980 = vmatprep.subr.mxu0 0.0
        %981 = vmatpush1.xpose.msra.mxu0 0.0
        %982 = vmatprep.subr.mxu0 0.0
        %983 = vmatpush1.xpose.msra.mxu0 0.0
        %984 = vmatprep.subr.mxu0 0.0
        %985 = vmatpush1.xpose.msra.mxu0 0.0
        %986 = vmatprep.subr.mxu0 0.0
        %987 = vmatpush1.xpose.msra.mxu0 0.0
        %988 = vmatprep.subr.mxu0 0.0
        %989 = vmatpush1.xpose.msra.mxu0 0.0
        %990 = vmatprep.subr.mxu0 0.0
        %991 = vmatpush1.xpose.msra.mxu0 0.0
        %992 = vmatprep.subr.mxu0 0.0
        %993 = vmatpush1.xpose.msra.mxu0 0.0
        %994 = vmatprep.mubr.f32.mxu0 0.0
        %995 = vmatmul.mubr.f32.gmra.mrb[0].mxu0 %v925
        %v996 = vpop.f32.mrb[0].mxu0
        %v997 = vadd.f32 0.0, %v996
        %v998 = vpop.f32.mrb[0].mxu0
        %999 = vdwg.mxu0
        %v1001 = vsel %vm771, %v467, 0
        %v1004 = vsel %vm771, %v622, 0
        %1006 = vmatprep.subr.mxu0 0.0
        %1007 = vmatpush1.xpose.msra.mxu0 %v1004
        %1008 = vmatprep.subr.mxu0 0.0
        %1009 = vmatpush1.xpose.msra.mxu0 0.0
        %1010 = vmatprep.subr.mxu0 0.0
        %1011 = vmatpush1.xpose.msra.mxu0 0.0
        %1012 = vmatprep.subr.mxu0 0.0
        %1013 = vmatpush1.xpose.msra.mxu0 0.0
        %1014 = vmatprep.subr.mxu0 0.0
        %1015 = vmatpush1.xpose.msra.mxu0 0.0
        %1016 = vmatprep.subr.mxu0 0.0
        %1017 = vmatpush1.xpose.msra.mxu0 0.0
        %1018 = vmatprep.subr.mxu0 0.0
        %1019 = vmatpush1.xpose.msra.mxu0 0.0
        %1020 = vmatprep.subr.mxu0 0.0
        %1021 = vmatpush1.xpose.msra.mxu0 0.0
        %1022 = vmatprep.subr.mxu0 0.0
        %1023 = vmatpush1.xpose.msra.mxu0 0.0
        %1024 = vmatprep.subr.mxu0 0.0
        %1025 = vmatpush1.xpose.msra.mxu0 0.0
        %1026 = vmatprep.subr.mxu0 0.0
        %1027 = vmatpush1.xpose.msra.mxu0 0.0
        %1028 = vmatprep.subr.mxu0 0.0
        %1029 = vmatpush1.xpose.msra.mxu0 0.0
        %1030 = vmatprep.subr.mxu0 0.0
        %1031 = vmatpush1.xpose.msra.mxu0 0.0
        %1032 = vmatprep.subr.mxu0 0.0
        %1033 = vmatpush1.xpose.msra.mxu0 0.0
        %1034 = vmatprep.subr.mxu0 0.0
        %1035 = vmatpush1.xpose.msra.mxu0 0.0
        %1036 = vmatprep.subr.mxu0 0.0
        %1037 = vmatpush1.xpose.msra.mxu0 0.0
        %1038 = vmatprep.subr.mxu0 0.0
        %1039 = vmatpush1.xpose.msra.mxu0 0.0
        %1040 = vmatprep.subr.mxu0 0.0
        %1041 = vmatpush1.xpose.msra.mxu0 0.0
        %1042 = vmatprep.subr.mxu0 0.0
        %1043 = vmatpush1.xpose.msra.mxu0 0.0
        %1044 = vmatprep.subr.mxu0 0.0
        %1045 = vmatpush1.xpose.msra.mxu0 0.0
        %1046 = vmatprep.subr.mxu0 0.0
        %1047 = vmatpush1.xpose.msra.mxu0 0.0
        %1048 = vmatprep.subr.mxu0 0.0
        %1049 = vmatpush1.xpose.msra.mxu0 0.0
        %1050 = vmatprep.subr.mxu0 0.0
        %1051 = vmatpush1.xpose.msra.mxu0 0.0
        %1052 = vmatprep.subr.mxu0 0.0
        %1053 = vmatpush1.xpose.msra.mxu0 0.0
        %1054 = vmatprep.subr.mxu0 0.0
        %1055 = vmatpush1.xpose.msra.mxu0 0.0
        %1056 = vmatprep.subr.mxu0 0.0
        %1057 = vmatpush1.xpose.msra.mxu0 0.0
        %1058 = vmatprep.subr.mxu0 0.0
        %1059 = vmatpush1.xpose.msra.mxu0 0.0
        %1060 = vmatprep.subr.mxu0 0.0
        %1061 = vmatpush1.xpose.msra.mxu0 0.0
        %1062 = vmatprep.subr.mxu0 0.0
        %1063 = vmatpush1.xpose.msra.mxu0 0.0
        %1064 = vmatprep.subr.mxu0 0.0
        %1065 = vmatpush1.xpose.msra.mxu0 0.0
        %1066 = vmatprep.subr.mxu0 0.0
        %1067 = vmatpush1.xpose.msra.mxu0 0.0
        %1068 = vmatprep.subr.mxu0 0.0
        %1069 = vmatpush1.xpose.msra.mxu0 0.0
        %1070 = vmatprep.mubr.f32.mxu0 0.0
        %1071 = vmatmul.mubr.f32.gmra.mrb[0].mxu0 %v1001
        %v1072 = vpop.f32.mrb[0].mxu0
        %v1073 = vadd.f32 0.0, %v1072
        %v1074 = vpop.f32.mrb[0].mxu0
        %1075 = vdwg.mxu0
        %v1076 = vsel %vm771, %v845, -inf
        %1077 = vmax.xlane.f32.xlu0 %v1076
        %v1078 = vpop.xlane.xlu0 %1077
        %v1079 = vsel %vm771, %v921, -inf
        %1080 = vmax.xlane.f32.xlu0 %v1079
        %v1081 = vpop.xlane.xlu0 %1080
        %v1082 = vsel %vm771, %v997, -inf
        %1083 = vmax.xlane.f32.xlu0 %v1082
        %v1084 = vpop.xlane.xlu0 %1083
        %v1085 = vsel %vm771, %v1073, -inf
        %1086 = vmax.xlane.f32.xlu0 %v1085
        %v1087 = vpop.xlane.xlu0 %1086
        %v1088 = vsub.f32 %v845, %v1078
        %v1089 = vsub.f32 %v921, %v1081
        %v1090 = vsub.f32 %v997, %v1084
        %v1091 = vsub.f32 %v1073, %v1087
        %v1092 = vmul.f32 %v1088, 1.442695
        %v1093 = vpow.pop %v1092
        %v1094 = vmul.f32 %v1089, 1.442695
        %v1095 = vpow.pop %v1094
        %v1096 = vmul.f32 %v1090, 1.442695
        %v1097 = vpow.pop %v1096
        %v1098 = vmul.f32 %v1091, 1.442695
        %v1099 = vpow.pop %v1098
        %v1100 = vsel %vm771, %v1093, 0.0
        %1101 = vadd.xlane.f32.xlu0 %v1100
        %v1102 = vpop.xlane.xlu0 %1101
        %v1103 = vsel %vm771, %v1095, 0.0
        %1104 = vadd.xlane.f32.xlu0 %v1103
        %v1105 = vpop.xlane.xlu0 %1104
        %v1106 = vsel %vm771, %v1097, 0.0
        %1107 = vadd.xlane.f32.xlu0 %v1106
        %v1108 = vpop.xlane.xlu0 %1107
        %v1109 = vsel %vm771, %v1099, 0.0
        %1110 = vadd.xlane.f32.xlu0 %v1109
        %v1111 = vpop.xlane.xlu0 %1110
        %v1113 = vsel %vm771, %v1093, 0
        %1115 = vmatprep.subr.mxu0 0.0
        %1116 = vmatpush1.msra.mxu0 %v767
        %1117 = vmatprep.subr.mxu0 0.0
        %1118 = vmatpush1.msra.mxu0 0.0
        %1119 = vmatprep.subr.mxu0 0.0
        %1120 = vmatpush1.msra.mxu0 0.0
        %1121 = vmatprep.subr.mxu0 0.0
        %1122 = vmatpush1.msra.mxu0 0.0
        %1123 = vmatprep.subr.mxu0 0.0
        %1124 = vmatpush1.msra.mxu0 0.0
        %1125 = vmatprep.subr.mxu0 0.0
        %1126 = vmatpush1.msra.mxu0 0.0
        %1127 = vmatprep.subr.mxu0 0.0
        %1128 = vmatpush1.msra.mxu0 0.0
        %1129 = vmatprep.subr.mxu0 0.0
        %1130 = vmatpush1.msra.mxu0 0.0
        %1131 = vmatprep.subr.mxu0 0.0
        %1132 = vmatpush1.msra.mxu0 0.0
        %1133 = vmatprep.subr.mxu0 0.0
        %1134 = vmatpush1.msra.mxu0 0.0
        %1135 = vmatprep.subr.mxu0 0.0
        %1136 = vmatpush1.msra.mxu0 0.0
        %1137 = vmatprep.subr.mxu0 0.0
        %1138 = vmatpush1.msra.mxu0 0.0
        %1139 = vmatprep.subr.mxu0 0.0
        %1140 = vmatpush1.msra.mxu0 0.0
        %1141 = vmatprep.subr.mxu0 0.0
        %1142 = vmatpush1.msra.mxu0 0.0
        %1143 = vmatprep.subr.mxu0 0.0
        %1144 = vmatpush1.msra.mxu0 0.0
        %1145 = vmatprep.subr.mxu0 0.0
        %1146 = vmatpush1.msra.mxu0 0.0
        %1147 = vmatprep.subr.mxu0 0.0
        %1148 = vmatpush1.msra.mxu0 0.0
        %1149 = vmatprep.subr.mxu0 0.0
        %1150 = vmatpush1.msra.mxu0 0.0
        %1151 = vmatprep.subr.mxu0 0.0
        %1152 = vmatpush1.msra.mxu0 0.0
        %1153 = vmatprep.subr.mxu0 0.0
        %1154 = vmatpush1.msra.mxu0 0.0
        %1155 = vmatprep.subr.mxu0 0.0
        %1156 = vmatpush1.msra.mxu0 0.0
        %1157 = vmatprep.subr.mxu0 0.0
        %1158 = vmatpush1.msra.mxu0 0.0
        %1159 = vmatprep.subr.mxu0 0.0
        %1160 = vmatpush1.msra.mxu0 0.0
        %1161 = vmatprep.subr.mxu0 0.0
        %1162 = vmatpush1.msra.mxu0 0.0
        %1163 = vmatprep.subr.mxu0 0.0
        %1164 = vmatpush1.msra.mxu0 0.0
        %1165 = vmatprep.subr.mxu0 0.0
        %1166 = vmatpush1.msra.mxu0 0.0
        %1167 = vmatprep.subr.mxu0 0.0
        %1168 = vmatpush1.msra.mxu0 0.0
        %1169 = vmatprep.subr.mxu0 0.0
        %1170 = vmatpush1.msra.mxu0 0.0
        %1171 = vmatprep.subr.mxu0 0.0
        %1172 = vmatpush1.msra.mxu0 0.0
        %1173 = vmatprep.subr.mxu0 0.0
        %1174 = vmatpush1.msra.mxu0 0.0
        %1175 = vmatprep.subr.mxu0 0.0
        %1176 = vmatpush1.msra.mxu0 0.0
        %1177 = vmatprep.subr.mxu0 0.0
        %1178 = vmatpush1.msra.mxu0 0.0
        %1179 = vmatprep.mubr.f32.mxu0 0.0
        %1180 = vmatmul.mubr.f32.gmra.mrb[0].mxu0 %v1113
        %v1181 = vpop.f32.mrb[0].mxu0
        %v1182 = vadd.f32 0.0, %v1181
        %v1183 = vpop.f32.mrb[0].mxu0
        %1184 = vdwg.mxu0
        %v1186 = vsel %vm771, %v1095, 0
        %1188 = vmatprep.subr.mxu0 0.0
        %1189 = vmatpush1.msra.mxu0 %v768
        %1190 = vmatprep.subr.mxu0 0.0
        %1191 = vmatpush1.msra.mxu0 0.0
        %1192 = vmatprep.subr.mxu0 0.0
        %1193 = vmatpush1.msra.mxu0 0.0
        %1194 = vmatprep.subr.mxu0 0.0
        %1195 = vmatpush1.msra.mxu0 0.0
        %1196 = vmatprep.subr.mxu0 0.0
        %1197 = vmatpush1.msra.mxu0 0.0
        %1198 = vmatprep.subr.mxu0 0.0
        %1199 = vmatpush1.msra.mxu0 0.0
        %1200 = vmatprep.subr.mxu0 0.0
        %1201 = vmatpush1.msra.mxu0 0.0
        %1202 = vmatprep.subr.mxu0 0.0
        %1203 = vmatpush1.msra.mxu0 0.0
        %1204 = vmatprep.subr.mxu0 0.0
        %1205 = vmatpush1.msra.mxu0 0.0
        %1206 = vmatprep.subr.mxu0 0.0
        %1207 = vmatpush1.msra.mxu0 0.0
        %1208 = vmatprep.subr.mxu0 0.0
        %1209 = vmatpush1.msra.mxu0 0.0
        %1210 = vmatprep.subr.mxu0 0.0
        %1211 = vmatpush1.msra.mxu0 0.0
        %1212 = vmatprep.subr.mxu0 0.0
        %1213 = vmatpush1.msra.mxu0 0.0
        %1214 = vmatprep.subr.mxu0 0.0
        %1215 = vmatpush1.msra.mxu0 0.0
        %1216 = vmatprep.subr.mxu0 0.0
        %1217 = vmatpush1.msra.mxu0 0.0
        %1218 = vmatprep.subr.mxu0 0.0
        %1219 = vmatpush1.msra.mxu0 0.0
        %1220 = vmatprep.subr.mxu0 0.0
        %1221 = vmatpush1.msra.mxu0 0.0
        %1222 = vmatprep.subr.mxu0 0.0
        %1223 = vmatpush1.msra.mxu0 0.0
        %1224 = vmatprep.subr.mxu0 0.0
        %1225 = vmatpush1.msra.mxu0 0.0
        %1226 = vmatprep.subr.mxu0 0.0
        %1227 = vmatpush1.msra.mxu0 0.0
        %1228 = vmatprep.subr.mxu0 0.0
        %1229 = vmatpush1.msra.mxu0 0.0
        %1230 = vmatprep.subr.mxu0 0.0
        %1231 = vmatpush1.msra.mxu0 0.0
        %1232 = vmatprep.subr.mxu0 0.0
        %1233 = vmatpush1.msra.mxu0 0.0
        %1234 = vmatprep.subr.mxu0 0.0
        %1235 = vmatpush1.msra.mxu0 0.0
        %1236 = vmatprep.subr.mxu0 0.0
        %1237 = vmatpush1.msra.mxu0 0.0
        %1238 = vmatprep.subr.mxu0 0.0
        %1239 = vmatpush1.msra.mxu0 0.0
        %1240 = vmatprep.subr.mxu0 0.0
        %1241 = vmatpush1.msra.mxu0 0.0
        %1242 = vmatprep.subr.mxu0 0.0
        %1243 = vmatpush1.msra.mxu0 0.0
        %1244 = vmatprep.subr.mxu0 0.0
        %1245 = vmatpush1.msra.mxu0 0.0
        %1246 = vmatprep.subr.mxu0 0.0
        %1247 = vmatpush1.msra.mxu0 0.0
        %1248 = vmatprep.subr.mxu0 0.0
        %1249 = vmatpush1.msra.mxu0 0.0
        %1250 = vmatprep.subr.mxu0 0.0
        %1251 = vmatpush1.msra.mxu0 0.0
        %1252 = vmatprep.mubr.f32.mxu0 0.0
        %1253 = vmatmul.mubr.f32.gmra.mrb[0].mxu0 %v1186
        %v1254 = vpop.f32.mrb[0].mxu0
        %v1255 = vadd.f32 0.0, %v1254
        %v1256 = vpop.f32.mrb[0].mxu0
        %1257 = vdwg.mxu0
        %v1259 = vsel %vm771, %v1097, 0
        %1261 = vmatprep.subr.mxu0 0.0
        %1262 = vmatpush1.msra.mxu0 %v769
        %1263 = vmatprep.subr.mxu0 0.0
        %1264 = vmatpush1.msra.mxu0 0.0
        %1265 = vmatprep.subr.mxu0 0.0
        %1266 = vmatpush1.msra.mxu0 0.0
        %1267 = vmatprep.subr.mxu0 0.0
        %1268 = vmatpush1.msra.mxu0 0.0
        %1269 = vmatprep.subr.mxu0 0.0
        %1270 = vmatpush1.msra.mxu0 0.0
        %1271 = vmatprep.subr.mxu0 0.0
        %1272 = vmatpush1.msra.mxu0 0.0
        %1273 = vmatprep.subr.mxu0 0.0
        %1274 = vmatpush1.msra.mxu0 0.0
        %1275 = vmatprep.subr.mxu0 0.0
        %1276 = vmatpush1.msra.mxu0 0.0
        %1277 = vmatprep.subr.mxu0 0.0
        %1278 = vmatpush1.msra.mxu0 0.0
        %1279 = vmatprep.subr.mxu0 0.0
        %1280 = vmatpush1.msra.mxu0 0.0
        %1281 = vmatprep.subr.mxu0 0.0
        %1282 = vmatpush1.msra.mxu0 0.0
        %1283 = vmatprep.subr.mxu0 0.0
        %1284 = vmatpush1.msra.mxu0 0.0
        %1285 = vmatprep.subr.mxu0 0.0
        %1286 = vmatpush1.msra.mxu0 0.0
        %1287 = vmatprep.subr.mxu0 0.0
        %1288 = vmatpush1.msra.mxu0 0.0
        %1289 = vmatprep.subr.mxu0 0.0
        %1290 = vmatpush1.msra.mxu0 0.0
        %1291 = vmatprep.subr.mxu0 0.0
        %1292 = vmatpush1.msra.mxu0 0.0
        %1293 = vmatprep.subr.mxu0 0.0
        %1294 = vmatpush1.msra.mxu0 0.0
        %1295 = vmatprep.subr.mxu0 0.0
        %1296 = vmatpush1.msra.mxu0 0.0
        %1297 = vmatprep.subr.mxu0 0.0
        %1298 = vmatpush1.msra.mxu0 0.0
        %1299 = vmatprep.subr.mxu0 0.0
        %1300 = vmatpush1.msra.mxu0 0.0
        %1301 = vmatprep.subr.mxu0 0.0
        %1302 = vmatpush1.msra.mxu0 0.0
        %1303 = vmatprep.subr.mxu0 0.0
        %1304 = vmatpush1.msra.mxu0 0.0
        %1305 = vmatprep.subr.mxu0 0.0
        %1306 = vmatpush1.msra.mxu0 0.0
        %1307 = vmatprep.subr.mxu0 0.0
        %1308 = vmatpush1.msra.mxu0 0.0
        %1309 = vmatprep.subr.mxu0 0.0
        %1310 = vmatpush1.msra.mxu0 0.0
        %1311 = vmatprep.subr.mxu0 0.0
        %1312 = vmatpush1.msra.mxu0 0.0
        %1313 = vmatprep.subr.mxu0 0.0
        %1314 = vmatpush1.msra.mxu0 0.0
        %1315 = vmatprep.subr.mxu0 0.0
        %1316 = vmatpush1.msra.mxu0 0.0
        %1317 = vmatprep.subr.mxu0 0.0
        %1318 = vmatpush1.msra.mxu0 0.0
        %1319 = vmatprep.subr.mxu0 0.0
        %1320 = vmatpush1.msra.mxu0 0.0
        %1321 = vmatprep.subr.mxu0 0.0
        %1322 = vmatpush1.msra.mxu0 0.0
        %1323 = vmatprep.subr.mxu0 0.0
        %1324 = vmatpush1.msra.mxu0 0.0
        %1325 = vmatprep.mubr.f32.mxu0 0.0
        %1326 = vmatmul.mubr.f32.gmra.mrb[0].mxu0 %v1259
        %v1327 = vpop.f32.mrb[0].mxu0
        %v1328 = vadd.f32 0.0, %v1327
        %v1329 = vpop.f32.mrb[0].mxu0
        %1330 = vdwg.mxu0
        %v1332 = vsel %vm771, %v1099, 0
        %1334 = vmatprep.subr.mxu0 0.0
        %1335 = vmatpush1.msra.mxu0 %v770
        %1336 = vmatprep.subr.mxu0 0.0
        %1337 = vmatpush1.msra.mxu0 0.0
        %1338 = vmatprep.subr.mxu0 0.0
        %1339 = vmatpush1.msra.mxu0 0.0
        %1340 = vmatprep.subr.mxu0 0.0
        %1341 = vmatpush1.msra.mxu0 0.0
        %1342 = vmatprep.subr.mxu0 0.0
        %1343 = vmatpush1.msra.mxu0 0.0
        %1344 = vmatprep.subr.mxu0 0.0
        %1345 = vmatpush1.msra.mxu0 0.0
        %1346 = vmatprep.subr.mxu0 0.0
        %1347 = vmatpush1.msra.mxu0 0.0
        %1348 = vmatprep.subr.mxu0 0.0
        %1349 = vmatpush1.msra.mxu0 0.0
        %1350 = vmatprep.subr.mxu0 0.0
        %1351 = vmatpush1.msra.mxu0 0.0
        %1352 = vmatprep.subr.mxu0 0.0
        %1353 = vmatpush1.msra.mxu0 0.0
        %1354 = vmatprep.subr.mxu0 0.0
        %1355 = vmatpush1.msra.mxu0 0.0
        %1356 = vmatprep.subr.mxu0 0.0
        %1357 = vmatpush1.msra.mxu0 0.0
        %1358 = vmatprep.subr.mxu0 0.0
        %1359 = vmatpush1.msra.mxu0 0.0
        %1360 = vmatprep.subr.mxu0 0.0
        %1361 = vmatpush1.msra.mxu0 0.0
        %1362 = vmatprep.subr.mxu0 0.0
        %1363 = vmatpush1.msra.mxu0 0.0
        %1364 = vmatprep.subr.mxu0 0.0
        %1365 = vmatpush1.msra.mxu0 0.0
        %1366 = vmatprep.subr.mxu0 0.0
        %1367 = vmatpush1.msra.mxu0 0.0
        %1368 = vmatprep.subr.mxu0 0.0
        %1369 = vmatpush1.msra.mxu0 0.0
        %1370 = vmatprep.subr.mxu0 0.0
        %1371 = vmatpush1.msra.mxu0 0.0
        %1372 = vmatprep.subr.mxu0 0.0
        %1373 = vmatpush1.msra.mxu0 0.0
        %1374 = vmatprep.subr.mxu0 0.0
        %1375 = vmatpush1.msra.mxu0 0.0
        %1376 = vmatprep.subr.mxu0 0.0
        %1377 = vmatpush1.msra.mxu0 0.0
        %1378 = vmatprep.subr.mxu0 0.0
        %1379 = vmatpush1.msra.mxu0 0.0
        %1380 = vmatprep.subr.mxu0 0.0
        %1381 = vmatpush1.msra.mxu0 0.0
        %1382 = vmatprep.subr.mxu0 0.0
        %1383 = vmatpush1.msra.mxu0 0.0
        %1384 = vmatprep.subr.mxu0 0.0
        %1385 = vmatpush1.msra.mxu0 0.0
        %1386 = vmatprep.subr.mxu0 0.0
        %1387 = vmatpush1.msra.mxu0 0.0
        %1388 = vmatprep.subr.mxu0 0.0
        %1389 = vmatpush1.msra.mxu0 0.0
        %1390 = vmatprep.subr.mxu0 0.0
        %1391 = vmatpush1.msra.mxu0 0.0
        %1392 = vmatprep.subr.mxu0 0.0
        %1393 = vmatpush1.msra.mxu0 0.0
        %1394 = vmatprep.subr.mxu0 0.0
        %1395 = vmatpush1.msra.mxu0 0.0
        %1396 = vmatprep.subr.mxu0 0.0
        %1397 = vmatpush1.msra.mxu0 0.0
        %1398 = vmatprep.mubr.f32.mxu0 0.0
        %1399 = vmatmul.mubr.f32.gmra.mrb[0].mxu0 %v1332
        %v1400 = vpop.f32.mrb[0].mxu0
        %v1401 = vadd.f32 0.0, %v1400
        %v1402 = vpop.f32.mrb[0].mxu0
        %1403 = vdwg.mxu0
        %v1404 = vrcp.pop %v1102
        %v1405 = vrcp.pop %v1105
        %v1406 = vrcp.pop %v1108
        %v1407 = vrcp.pop %v1111
        %v1408 = vmul.f32 %v1182, %v1404
        %v1409 = vmul.f32 %v1255, %v1405
        %v1410 = vmul.f32 %v1328, %v1406
        %v1411 = vmul.f32 %v1401, %v1407
        %v1412 = vcombine.low %v1408, %v1410
        %v1413 = vcombine.high %v1408, %v1410
        %v1415 = vunpack.c.l.s4 1983009808
        %v1416 = vunpack.c.0.s8 %v1415
        %v1417 = vlaneseq
        %v1418 = vshrl.u32 %v1417, 7
        %v1419 = vsub.s32 %v1416, %v1418
        %v1420 = vrot.slane %v1412, %v1419
        %v1422 = vunpack.c.l.s4 1983009808
        %v1423 = vunpack.c.0.s8 %v1422
        %v1424 = vlaneseq
        %v1425 = vshrl.u32 %v1424, 7
        %v1426 = vsub.s32 %v1423, %v1425
        %v1427 = vrot.slane %v1413, %v1426
        %v1428 = vcombine.low %v1409, %v1411
        %v1429 = vcombine.high %v1409, %v1411
        %v1431 = vunpack.c.l.s4 1983009808
        %v1432 = vunpack.c.0.s8 %v1431
        %v1433 = vlaneseq
        %v1434 = vshrl.u32 %v1433, 7
        %v1435 = vsub.s32 %v1432, %v1434
        %v1436 = vrot.slane %v1428, %v1435
        %v1438 = vunpack.c.l.s4 1983009808
        %v1439 = vunpack.c.0.s8 %v1438
        %v1440 = vlaneseq
        %v1441 = vshrl.u32 %v1440, 7
        %v1442 = vsub.s32 %v1439, %v1441
        %v1443 = vrot.slane %v1429, %v1442
        %v1444 = vcombine.low %v1420, %v1436
        %v1445 = vcombine.high %v1420, %v1436
        %v1447 = vunpack.c.l.s4 1934713408
        %v1448 = vunpack.c.0.s8 %v1447
        %v1449 = vlaneseq
        %v1450 = vshrl.u32 %v1449, 7
        %v1451 = vsub.s32 %v1448, %v1450
        %v1452 = vrot.slane %v1444, %v1451
        %v1454 = vunpack.c.l.s4 1934713408
        %v1455 = vunpack.c.0.s8 %v1454
        %v1456 = vlaneseq
        %v1457 = vshrl.u32 %v1456, 7
        %v1458 = vsub.s32 %v1455, %v1457
        %v1459 = vrot.slane %v1445, %v1458
        %v1460 = vcombine.low %v1427, %v1443
        %v1461 = vcombine.high %v1427, %v1443
        %v1463 = vunpack.c.l.s4 1934713408
        %v1464 = vunpack.c.0.s8 %v1463
        %v1465 = vlaneseq
        %v1466 = vshrl.u32 %v1465, 7
        %v1467 = vsub.s32 %v1464, %v1466
        %v1468 = vrot.slane %v1460, %v1467
        %v1470 = vunpack.c.l.s4 1934713408
        %v1471 = vunpack.c.0.s8 %v1470
        %v1472 = vlaneseq
        %v1473 = vshrl.u32 %v1472, 7
        %v1474 = vsub.s32 %v1471, %v1473
        %v1475 = vrot.slane %v1461, %v1474
        %v1476 = vcombine.high %v1452, 0.0
        %v1477 = vcombine.high %v1459, 0.0
        %v1478 = vcombine.high %v1468, 0.0
        %v1479 = vcombine.high %v1475, 0.0
        %v1480 = vcombine.low %v1452, %v1459
        %v1482 = vunpack.c.l.s4 1983009808
        %v1483 = vunpack.c.0.s8 %v1482
        %v1484 = vlaneseq
        %v1485 = vshrl.u32 %v1484, 7
        %v1486 = vsub.s32 %v1483, %v1485
        %v1487 = vrot.slane %v1480, %v1486
        %v1488 = vcombine.low %v1476, %v1477
        %v1490 = vunpack.c.l.s4 1983009808
        %v1491 = vunpack.c.0.s8 %v1490
        %v1492 = vlaneseq
        %v1493 = vshrl.u32 %v1492, 7
        %v1494 = vsub.s32 %v1491, %v1493
        %v1495 = vrot.slane %v1488, %v1494
        %v1496 = vcombine.low %v1468, %v1475
        %v1498 = vunpack.c.l.s4 1983009808
        %v1499 = vunpack.c.0.s8 %v1498
        %v1500 = vlaneseq
        %v1501 = vshrl.u32 %v1500, 7
        %v1502 = vsub.s32 %v1499, %v1501
        %v1503 = vrot.slane %v1496, %v1502
        %v1504 = vcombine.low %v1478, %v1479
        %v1506 = vunpack.c.l.s4 1983009808
        %v1507 = vunpack.c.0.s8 %v1506
        %v1508 = vlaneseq
        %v1509 = vshrl.u32 %v1508, 7
        %v1510 = vsub.s32 %v1507, %v1509
        %v1511 = vrot.slane %v1504, %v1510
        %v1512 = vcombine.low %v1487, %v1495
        %v1513 = vcombine.high %v1487, %v1495
        %v1515 = vunpack.c.l.s4 1934713408
        %v1516 = vunpack.c.0.s8 %v1515
        %v1517 = vlaneseq
        %v1518 = vshrl.u32 %v1517, 7
        %v1519 = vsub.s32 %v1516, %v1518
        %v1520 = vrot.slane %v1512, %v1519
        %v1522 = vunpack.c.l.s4 1934713408
        %v1523 = vunpack.c.0.s8 %v1522
        %v1524 = vlaneseq
        %v1525 = vshrl.u32 %v1524, 7
        %v1526 = vsub.s32 %v1523, %v1525
        %v1527 = vrot.slane %v1513, %v1526
        %v1528 = vcombine.low %v1503, %v1511
        %v1529 = vcombine.high %v1503, %v1511
        %v1531 = vunpack.c.l.s4 1934713408
        %v1532 = vunpack.c.0.s8 %v1531
        %v1533 = vlaneseq
        %v1534 = vshrl.u32 %v1533, 7
        %v1535 = vsub.s32 %v1532, %v1534
        %v1536 = vrot.slane %v1528, %v1535
        %v1538 = vunpack.c.l.s4 1934713408
        %v1539 = vunpack.c.0.s8 %v1538
        %v1540 = vlaneseq
        %v1541 = vshrl.u32 %v1540, 7
        %v1542 = vsub.s32 %v1539, %v1541
        %v1543 = vrot.slane %v1529, %v1542
        %v1544 = vcombine.low %v1520, %v1536
        %v1545 = vcombine.high %v1520, %v1536
        %v1546 = vcombine.low %v1527, %v1543
        %v1547 = vcombine.high %v1527, %v1543
        %1549 = vrot.lane.b32.xlu0 %v1545, 8
        %v1550 = vpop.permute.xlu0 %1549
        %1553 = vrot.lane.b32.xlu0 %v1546, 16
        %v1554 = vpop.permute.xlu0 %1553
        %1557 = vrot.lane.b32.xlu0 %v1547, 24
        %v1558 = vpop.permute.xlu0 %1557
        %v1560 = vsel %vm771, %v1544, %v1550
        %vm1561 = vcmask 130048
        %v1562 = vsel %vm1561, %v1560, %v1554
        %vm1563 = vcmask 195584
        %v1564 = vsel %vm1563, %v1562, %v1558
        %v1565 = vld [vmem:[#allocation7] sm:$0xff]
        %v1566 = vld [vmem:[#allocation7 + $0x8] sm:$0xff]
        %v1567 = vld [vmem:[#allocation7 + $0x10] sm:$0xff]
        %v1568 = vld [vmem:[#allocation7 + $0x18] sm:$0xff]
        %v1569 = vld [vmem:[%s3] sm:$0x1]
        %v1571 = vlaneseq
        %v1572 = vshrl.u32 %v1571, 7
        %v1573 = vsub.s32 0, %v1572
        %v1574 = vrot.slane %v1569, %v1573
        %v1577 = vsel %vm247, %v1564, 0
        %1579 = vmatprep.subr.mxu0 0.0
        %1580 = vmatpush1.msra.mxu0 %v1565
        %1581 = vmatprep.subr.mxu0 0.0
        %1582 = vmatpush1.msra.mxu0 %v1566
        %1583 = vmatprep.subr.mxu0 0.0
        %1584 = vmatpush1.msra.mxu0 %v1567
        %1585 = vmatprep.subr.mxu0 0.0
        %1586 = vmatpush1.msra.mxu0 %v1568
        %1587 = vmatprep.subr.mxu0 0.0
        %1588 = vmatpush1.msra.mxu0 0.0
        %1589 = vmatprep.subr.mxu0 0.0
        %1590 = vmatpush1.msra.mxu0 0.0
        %1591 = vmatprep.subr.mxu0 0.0
        %1592 = vmatpush1.msra.mxu0 0.0
        %1593 = vmatprep.subr.mxu0 0.0
        %1594 = vmatpush1.msra.mxu0 0.0
        %1595 = vmatprep.subr.mxu0 0.0
        %1596 = vmatpush1.msra.mxu0 0.0
        %1597 = vmatprep.subr.mxu0 0.0
        %1598 = vmatpush1.msra.mxu0 0.0
        %1599 = vmatprep.subr.mxu0 0.0
        %1600 = vmatpush1.msra.mxu0 0.0
        %1601 = vmatprep.subr.mxu0 0.0
        %1602 = vmatpush1.msra.mxu0 0.0
        %1603 = vmatprep.subr.mxu0 0.0
        %1604 = vmatpush1.msra.mxu0 0.0
        %1605 = vmatprep.subr.mxu0 0.0
        %1606 = vmatpush1.msra.mxu0 0.0
        %1607 = vmatprep.subr.mxu0 0.0
        %1608 = vmatpush1.msra.mxu0 0.0
        %1609 = vmatprep.subr.mxu0 0.0
        %1610 = vmatpush1.msra.mxu0 0.0
        %1611 = vmatprep.subr.mxu0 0.0
        %1612 = vmatpush1.msra.mxu0 0.0
        %1613 = vmatprep.subr.mxu0 0.0
        %1614 = vmatpush1.msra.mxu0 0.0
        %1615 = vmatprep.subr.mxu0 0.0
        %1616 = vmatpush1.msra.mxu0 0.0
        %1617 = vmatprep.subr.mxu0 0.0
        %1618 = vmatpush1.msra.mxu0 0.0
        %1619 = vmatprep.subr.mxu0 0.0
        %1620 = vmatpush1.msra.mxu0 0.0
        %1621 = vmatprep.subr.mxu0 0.0
        %1622 = vmatpush1.msra.mxu0 0.0
        %1623 = vmatprep.subr.mxu0 0.0
        %1624 = vmatpush1.msra.mxu0 0.0
        %1625 = vmatprep.subr.mxu0 0.0
        %1626 = vmatpush1.msra.mxu0 0.0
        %1627 = vmatprep.subr.mxu0 0.0
        %1628 = vmatpush1.msra.mxu0 0.0
        %1629 = vmatprep.subr.mxu0 0.0
        %1630 = vmatpush1.msra.mxu0 0.0
        %1631 = vmatprep.subr.mxu0 0.0
        %1632 = vmatpush1.msra.mxu0 0.0
        %1633 = vmatprep.subr.mxu0 0.0
        %1634 = vmatpush1.msra.mxu0 0.0
        %1635 = vmatprep.subr.mxu0 0.0
        %1636 = vmatpush1.msra.mxu0 0.0
        %1637 = vmatprep.subr.mxu0 0.0
        %1638 = vmatpush1.msra.mxu0 0.0
        %1639 = vmatprep.subr.mxu0 0.0
        %1640 = vmatpush1.msra.mxu0 0.0
        %1641 = vmatprep.subr.mxu0 0.0
        %1642 = vmatpush1.msra.mxu0 0.0
        %1643 = vmatprep.mubr.f32.mxu0 0.0
        %1644 = vmatmul.mubr.f32.gmra.mrb[0].mxu0 %v1577
        %v1645 = vpop.f32.mrb[0].mxu0
        %v1646 = vadd.f32 %v1574, %v1645
        %v1647 = vpop.f32.mrb[0].mxu0
        %1648 = vdwg.mxu0
        %1649 = vst.msk [vmem:[%s241] sm:$0xff] %vm247, %v1646
        %s1650 = sand.u32 %s119, 1
        %s1651 = scalar_lea.sflag [#allocation4], %s1650
        %s1652 = sand.u32 %s119, 1
        %s1653 = smul.addr %s1652, 8
        %s1654 = scalar_lea.vmem [#allocation8], %s1653
        // Predicated region
        $region49: #{tpu_custom_call.1} parent=35 // pred_check
          %p1655 = pneg %p129
        $region50: #{tpu_custom_call.1} parent=35 // pred_check_branch
          %1657 = sbr.rel (%p1655) target = $region52
        $region51: #{tpu_custom_call.1} parent=35 // pred_region
          %s1659 = ssub.s32 128, 128
          %1660 = vsyncadd %s1651, %s1659
          %s1661 = smul.addr %s22, 128
          %s1662 = scalar_lea.hbm %s4, %s1661
          %s1664 = sshll.u32 %s1654, 4
          %s1665 = int_to_ptr.vmem [resolvable:$true] %s1664
          %1667 = dma.vmem_to_hbm [thread:$0]  %s1665, 128, %s1662, %s1651
        $region52: #{tpu_custom_call.1} parent=35 // pred_fallthru
          _
      $region36: #{tpu_custom_call.1} parent=5 // pred_fallthru
        _
      %p1668 = scmp.le.s32.totalorder 2, %s17
      // Predicated region
      $region53: #{tpu_custom_call.1} parent=5 // pred_check
        %p1669 = pneg %p1668
      $region54: #{tpu_custom_call.1} parent=5 // pred_check_branch
        %1671 = sbr.rel (%p1669) target = $region56
      $region55: #{tpu_custom_call.1} parent=5 // pred_region
        %s1672 = ssub.s32 %s17, 2
        // Predicated region
        $region57: #{tpu_custom_call.1} parent=55 // pred_check
          %p1673 = pneg %p135
        $region58: #{tpu_custom_call.1} parent=55 // pred_check_branch
          %1675 = sbr.rel (%p1673) target = $region60
        $region59: #{tpu_custom_call.1} parent=55 // pred_region
          %s1676 = sand.u32 %s120, 1
          %s1677 = scalar_lea.sflag [#allocation4], %s1676
          %s1678 = sand.u32 %s120, 1
          %s1679 = smul.addr %s1678, 8
          %s1680 = scalar_lea.vmem [#allocation8], %s1679
          %1681 = dma.done %s1677, 128
        $region60: #{tpu_custom_call.1} parent=55 // pred_fallthru
          _
      $region56: #{tpu_custom_call.1} parent=5 // pred_fallthru
        _
    $region6: #{tpu_custom_call.1} parent=1 // loop_footer
      %s21 = sadd.s32 1, %s17
    $region7: #{tpu_custom_call.1} parent=1 // loop_footer_branch
      %16 = sbr.rel target = $region3
    $region8: #{tpu_custom_call.1} parent=1 // loop_exit
      _
    %1682 = vsyncpa [#allocation3], 1
    %s1683 = scalar_lea.sflag [#allocation3], 1
    %1684 = vsyncpa %s1683, 1
    %1685 = vsyncpa [#allocation6], 1
    %1686 = vsyncpa [#allocation4], 1
    %s1687 = scalar_lea.sflag [#allocation4], 1
    %1688 = vsyncpa %s1687, 1

</llo_original>
